<compile_context>
chip_gen: v7x
topology: tpu7x:2x2x1
jax: 0.10.0
libtpu: 0.0.40
codegen_flags: <defaults>
</compile_context>

<pallas_src>
import functools

import jax
import jax.numpy as jnp
from jax.experimental import pallas as pl
from jax.experimental.pallas import tpu as pltpu


def _activation(x, kind):
    if kind == "relu":
        return jnp.maximum(x, 0.0)
    if kind == "silu":
        return x * jax.nn.sigmoid(x)
    if kind == "gelu":
        return jax.nn.gelu(x, approximate=True)
    raise ValueError(f"unknown activation {kind!r}")


def _resnet1d_fused_kernel(x_ref, w1_ref, b1_ref, w2_ref, b2_ref, o_ref,
                           *, dilations, T, C, BT, activation, compute_dtype):
    """All residual blocks for one batch tile; activations stay resident in VMEM.

    Channels-first (NCL) layout, identical to the PyTorch module, so no transposes are
    needed anywhere: conv1/conv2 become (C,C) @ (C,T) matmuls.

    x_ref : (BT, C, T)    VMEM, input dtype
    w1_ref: (L, 3, C, C)  VMEM, compute_dtype   (tap k multiplies a[:, t + (k-1)*d])
    b1_ref: (L, C, 1)     VMEM, f32
    w2_ref: (L, C, C)     VMEM, compute_dtype
    b2_ref: (L, C, 1)     VMEM, f32
    o_ref : (BT, C, T)    VMEM
    """
    for b in range(BT):
        x = x_ref[b].astype(jnp.float32)                          # (C, T) residual stream, f32
        for l, d in enumerate(dilations):
            a = _activation(x, activation).astype(compute_dtype)  # conv1 input (bf16 for MXU)
            if d < T:
                zpad = jnp.zeros((C, d), dtype=a.dtype)
                a_m = jnp.concatenate([zpad, a[:, : T - d]], axis=1)   # a[:, t-d], zero padded
                a_p = jnp.concatenate([a[:, d:], zpad], axis=1)        # a[:, t+d], zero padded
            else:
                # dilation >= T: both shifted taps fall entirely inside the zero padding
                a_m = jnp.zeros_like(a)
                a_p = jnp.zeros_like(a)

            # Three accumulating dots (one per tap) instead of a (M, 3C) concat matmul.
            h = (jnp.dot(w1_ref[l, 0], a_m, preferred_element_type=jnp.float32)
                 + jnp.dot(w1_ref[l, 1], a, preferred_element_type=jnp.float32)
                 + jnp.dot(w1_ref[l, 2], a_p, preferred_element_type=jnp.float32)
                 + b1_ref[l])                                       # (C, T) f32, bias (C, 1)
            h = _activation(h, activation).astype(compute_dtype)
            y = jnp.dot(w2_ref[l], h, preferred_element_type=jnp.float32) + b2_ref[l]
            x = x + y                                               # residual connection
        o_ref[b] = x.astype(o_ref.dtype)


def init_resnet1d_params(key, n_in, n_depth, dilation_growth_rate=1, reverse_dilation=True):
    """Deterministic synthetic parameters, PyTorch Conv1d weight convention (out, in, k)."""
    params = []
    dilations = [dilation_growth_rate ** depth for depth in range(n_depth)]
    if reverse_dilation:
        dilations = dilations[::-1]
    for d in dilations:
        key, k1, k2, k3, k4 = jax.random.split(key, 5)
        w1 = jax.random.normal(k1, (n_in, n_in, 3), jnp.float32) * 0.05  # (out, in, 3)
        b1 = jax.random.normal(k2, (n_in,), jnp.float32) * 0.05
        w2 = jax.random.normal(k3, (n_in, n_in, 1), jnp.float32) * 0.05  # (out, in, 1)
        b2 = jax.random.normal(k4, (n_in,), jnp.float32) * 0.05
        params.append({"w1": w1, "b1": b1, "w2": w2, "b2": b2, "dilation": d})
    return params


def prepare_resnet1d_params(params, compute_dtype=jnp.bfloat16):
    """One-time host-side weight prep (hoisted out of the forward pass).

    Stacks layers and reorders conv1 taps so every tap is a ready-to-use (C_out, C_in)
    LHS matrix in the MXU-native compute dtype; biases stay f32 as (C, 1) columns.
    """
    C = params[0]["w1"].shape[0]
    w1 = jnp.stack([jnp.transpose(p["w1"], (2, 0, 1)) for p in params]).astype(compute_dtype)  # (L,3,C,C)
    b1 = jnp.stack([p["b1"].reshape(C, 1) for p in params]).astype(jnp.float32)                # (L,C,1)
    w2 = jnp.stack([p["w2"][:, :, 0] for p in params]).astype(compute_dtype)                   # (L,C,C)
    b2 = jnp.stack([p["b2"].reshape(C, 1) for p in params]).astype(jnp.float32)                # (L,C,1)
    dilations = tuple(int(p["dilation"]) for p in params)
    return {"w1": w1, "b1": b1, "w2": w2, "b2": b2, "dilations": dilations,
            "compute_dtype": compute_dtype}


def _tpu_vmem_and_cores():
    """Per-TensorCore VMEM capacity and TensorCore count (best effort, safe fallbacks)."""
    vmem_cap = 64 * 2 ** 20      # conservative fallback (v7x per-core size)
    n_cores = 1
    try:
        info = pltpu.get_tpu_info()
        vmem_cap = int(getattr(info, "vmem_capacity_bytes", vmem_cap))
        for attr in ("num_cores", "tensorcore_count", "cores_per_chip", "num_tensorcores"):
            v = getattr(info, attr, None)
            if v:
                n_cores = max(n_cores, int(v))
                break
    except Exception:
        pass
    return vmem_cap, n_cores


def _pick_batch_tile(B, T, C, L, weight_bytes, vmem_budget, prefer_multi_step):
    """Largest divisor of B (capped to bound in-kernel unrolling) whose blocks fit VMEM."""
    best = 1
    for bt in range(1, B + 1):
        if B % bt != 0 or bt > 8:
            continue
        io_bytes = 2 * 2 * bt * C * T * 4        # in + out blocks, double buffered, f32
        live_bytes = 6 * bt * C * T * 4          # rough bound on in-kernel intermediates
        if io_bytes + live_bytes + weight_bytes > vmem_budget:
            continue
        if prefer_multi_step and B > 1 and B // bt < 2:
            continue                             # keep >=2 grid steps for multi-core chips
        best = bt
    return best


def resnet1d_forward(x_ncl, prepared, *, activation="relu"):
    """Full Resnet1D forward. x_ncl: (B, C, T), exactly like the PyTorch module."""
    w1, b1, w2, b2 = prepared["w1"], prepared["b1"], prepared["w2"], prepared["b2"]
    dilations = prepared["dilations"]
    compute_dtype = prepared["compute_dtype"]
    B, C, T = x_ncl.shape
    L = len(dilations)

    vmem_cap, n_cores = _tpu_vmem_and_cores()
    vmem_budget = min(int(vmem_cap * 3 // 4), 100 * 2 ** 20)   # ~48 MiB on v7x, ~96 MiB on v5e/v6e

    wbytes = jnp.dtype(compute_dtype).itemsize
    weight_bytes = 2 * L * (4 * C * C * wbytes + 2 * C * 4)    # double-buffered weights + f32 biases

    bt = _pick_batch_tile(B, T, C, L, weight_bytes, vmem_budget,
                          prefer_multi_step=n_cores > 1)
    grid = (B // bt,)

    kernel = functools.partial(
        _resnet1d_fused_kernel,
        dilations=dilations, T=T, C=C, BT=bt,
        activation=activation, compute_dtype=compute_dtype,
    )

    flops = 2 * L * B * T * (3 * C * C + C * C)
    transcendentals = 0 if activation == "relu" else 2 * L * B * T * C
    bytes_accessed = (2 * B * C * T * 4                        # activations in + out (no transposes)
                      + L * (4 * C * C * wbytes + 2 * C * 4))  # weights + biases

    out = pl.pallas_call(
        kernel,
        out_shape=jax.ShapeDtypeStruct((B, C, T), x_ncl.dtype),
        grid_spec=pltpu.PrefetchScalarGridSpec(
            num_scalar_prefetch=0,
            grid=grid,
            in_specs=[
                pl.BlockSpec((bt, C, T), lambda i: (i, 0, 0)),
                pl.BlockSpec((L, 3, C, C), lambda i: (0, 0, 0, 0)),
                pl.BlockSpec((L, C, 1), lambda i: (0, 0, 0)),
                pl.BlockSpec((L, C, C), lambda i: (0, 0, 0)),
                pl.BlockSpec((L, C, 1), lambda i: (0, 0, 0)),
            ],
            out_specs=pl.BlockSpec((bt, C, T), lambda i: (i, 0, 0)),
        ),
        compiler_params=pltpu.CompilerParams(
            dimension_semantics=("parallel",),
            vmem_limit_bytes=int(vmem_budget),
        ),
        cost_estimate=pl.CostEstimate(
            flops=int(flops),
            transcendentals=int(transcendentals),
            bytes_accessed=int(bytes_accessed),
        ),
    )(x_ncl, w1, b1, w2, b2)

    return out


def _reference_forward(x_ncl, params, activation="relu"):
    """Pure-JAX reference using lax.conv_general_dilated (matches PyTorch Conv1d)."""
    x = x_ncl
    for p in params:
        x_orig = x
        a = _activation(x, activation)
        d = p["dilation"]
        h = jax.lax.conv_general_dilated(
            a, p["w1"], window_strides=(1,), padding=[(d, d)],
            rhs_dilation=(d,), dimension_numbers=("NCH", "OIH", "NCH"),
        ) + p["b1"][None, :, None]
        h = _activation(h, activation)
        y = jax.lax.conv_general_dilated(
            h, p["w2"], window_strides=(1,), padding=[(0, 0)],
            dimension_numbers=("NCH", "OIH", "NCH"),
        ) + p["b2"][None, :, None]
        x = y + x_orig
    return x


if __name__ == "__main__":
    B, C, T = 2, 32, 64
    n_depth = 3
    dilation_growth_rate = 2

    key = jax.random.PRNGKey(0)
    key, kx = jax.random.split(key)
    x = jax.random.normal(kx, (B, C, T), jnp.float32)

    params = init_resnet1d_params(
        key, n_in=C, n_depth=n_depth,
        dilation_growth_rate=dilation_growth_rate, reverse_dilation=True,
    )
    prepared = prepare_resnet1d_params(params)   # bf16 weights for the MXU

    # Resnet1D default activation is 'relu'; 'silu' exercises the spec's nonlinearity class.
    for act in ("relu", "silu"):
        out = jax.block_until_ready(resnet1d_forward(x, prepared, activation=act))
        ref = jax.block_until_ready(_reference_forward(x, params, activation=act))
        assert out.shape == (B, C, T)
        max_err = float(jnp.max(jnp.abs(out - ref)))
        # bf16 matmul operands -> relaxed tolerance vs. the f32 reference
        assert jnp.allclose(out, ref, atol=2e-2, rtol=2e-2), (act, max_err)

    print("KERNEL_OK")
</pallas_src>

<mosaic_0001>
module attributes {stable_mosaic.version = 11 : i64} {
  func.func @_resnet1d_fused_kernel(%arg0: i32, %arg1: memref<2x32x64xf32, #tpu.memory_space<vmem>>, %arg2: memref<3x3x32x32xbf16, #tpu.memory_space<vmem>>, %arg3: memref<3x32x1xf32, #tpu.memory_space<vmem>>, %arg4: memref<3x32x32xbf16, #tpu.memory_space<vmem>>, %arg5: memref<3x32x1xf32, #tpu.memory_space<vmem>>, %arg6: memref<2x32x64xf32, #tpu.memory_space<vmem>>) attributes {dimension_semantics = [#tpu.dimension_semantics<parallel>], iteration_bounds = array<i64: 1>, scalar_prefetch = 0 : i64, scratch_operands = 0 : i64, tpu.core_type = #tpu.core_type<tc>, window_params = [{transform_indices = @transform_0, window_bounds = array<i64: 2, 32, 64>}, {pipeline_mode = #tpu.pipeline_mode<synchronous>, transform_indices = @transform_1, window_bounds = array<i64: 3, 3, 32, 32>}, {pipeline_mode = #tpu.pipeline_mode<synchronous>, transform_indices = @transform_2, window_bounds = array<i64: 3, 32, 1>}, {pipeline_mode = #tpu.pipeline_mode<synchronous>, transform_indices = @transform_3, window_bounds = array<i64: 3, 32, 32>}, {pipeline_mode = #tpu.pipeline_mode<synchronous>, transform_indices = @transform_4, window_bounds = array<i64: 3, 32, 1>}, {transform_indices = @transform_5, window_bounds = array<i64: 2, 32, 64>}]} {
    %c0 = arith.constant 0 : index
    %c0_0 = arith.constant 0 : index
    %c0_1 = arith.constant 0 : index
    %0 = vector.load %arg1[%c0, %c0_0, %c0_1] : memref<2x32x64xf32, #tpu.memory_space<vmem>>, vector<1x32x64xf32>
    %1 = vector.shape_cast %0 : vector<1x32x64xf32> to vector<32x64xf32>
    %cst = arith.constant 0.000000e+00 : f32
    %2 = vector.broadcast %cst : f32 to vector<32x64xf32>
    %3 = arith.maximumf %1, %2 : vector<32x64xf32>
    %4 = arith.truncf %3 : vector<32x64xf32> to vector<32x64xbf16>
    %cst_2 = arith.constant 0.000000e+00 : bf16
    %5 = vector.broadcast %cst_2 : bf16 to vector<32x4xbf16>
    %6 = vector.extract_strided_slice %4 {offsets = [0, 0], sizes = [32, 60], strides = [1, 1]} : vector<32x64xbf16> to vector<32x60xbf16>
    %7 = tpu.concatenate %5, %6 in 1 : vector<32x4xbf16>, vector<32x60xbf16> -> vector<32x64xbf16>
    %8 = vector.extract_strided_slice %4 {offsets = [0, 4], sizes = [32, 60], strides = [1, 1]} : vector<32x64xbf16> to vector<32x60xbf16>
    %9 = tpu.concatenate %8, %5 in 1 : vector<32x60xbf16>, vector<32x4xbf16> -> vector<32x64xbf16>
    %c0_3 = arith.constant 0 : index
    %c0_4 = arith.constant 0 : index
    %c0_5 = arith.constant 0 : index
    %c0_6 = arith.constant 0 : index
    %10 = vector.load %arg2[%c0_3, %c0_4, %c0_5, %c0_6] : memref<3x3x32x32xbf16, #tpu.memory_space<vmem>>, vector<1x1x32x32xbf16>
    %11 = vector.shape_cast %10 : vector<1x1x32x32xbf16> to vector<32x32xbf16>
    %cst_7 = arith.constant dense<0.000000e+00> : vector<32x64xf32>
    %12 = tpu.matmul %11, %7, %cst_7 {dimension_numbers = #tpu.dot_dimension_numbers<[1], [0], [0], [1], [0, 0, 1, 1], [], []>} : vector<32x32xbf16>, vector<32x64xbf16>, vector<32x64xf32> -> vector<32x64xf32>
    %c0_8 = arith.constant 0 : index
    %c1 = arith.constant 1 : index
    %c0_9 = arith.constant 0 : index
    %c0_10 = arith.constant 0 : index
    %13 = vector.load %arg2[%c0_8, %c1, %c0_9, %c0_10] : memref<3x3x32x32xbf16, #tpu.memory_space<vmem>>, vector<1x1x32x32xbf16>
    %14 = vector.shape_cast %13 : vector<1x1x32x32xbf16> to vector<32x32xbf16>
    %cst_11 = arith.constant dense<0.000000e+00> : vector<32x64xf32>
    %15 = tpu.matmul %14, %4, %cst_11 {dimension_numbers = #tpu.dot_dimension_numbers<[1], [0], [0], [1], [0, 0, 1, 1], [], []>} : vector<32x32xbf16>, vector<32x64xbf16>, vector<32x64xf32> -> vector<32x64xf32>
    %16 = arith.addf %12, %15 : vector<32x64xf32>
    %c0_12 = arith.constant 0 : index
    %c2 = arith.constant 2 : index
    %c0_13 = arith.constant 0 : index
    %c0_14 = arith.constant 0 : index
    %17 = vector.load %arg2[%c0_12, %c2, %c0_13, %c0_14] : memref<3x3x32x32xbf16, #tpu.memory_space<vmem>>, vector<1x1x32x32xbf16>
    %18 = vector.shape_cast %17 : vector<1x1x32x32xbf16> to vector<32x32xbf16>
    %cst_15 = arith.constant dense<0.000000e+00> : vector<32x64xf32>
    %19 = tpu.matmul %18, %9, %cst_15 {dimension_numbers = #tpu.dot_dimension_numbers<[1], [0], [0], [1], [0, 0, 1, 1], [], []>} : vector<32x32xbf16>, vector<32x64xbf16>, vector<32x64xf32> -> vector<32x64xf32>
    %20 = arith.addf %16, %19 : vector<32x64xf32>
    %c0_16 = arith.constant 0 : index
    %c0_17 = arith.constant 0 : index
    %c0_18 = arith.constant 0 : index
    %21 = vector.load %arg3[%c0_16, %c0_17, %c0_18] : memref<3x32x1xf32, #tpu.memory_space<vmem>>, vector<1x32x1xf32>
    %22 = vector.shape_cast %21 : vector<1x32x1xf32> to vector<32x1xf32>
    %23 = vector.broadcast %22 : vector<32x1xf32> to vector<32x64xf32>
    %24 = arith.addf %20, %23 : vector<32x64xf32>
    %cst_19 = arith.constant 0.000000e+00 : f32
    %25 = vector.broadcast %cst_19 : f32 to vector<32x64xf32>
    %26 = arith.maximumf %24, %25 : vector<32x64xf32>
    %27 = arith.truncf %26 : vector<32x64xf32> to vector<32x64xbf16>
    %c0_20 = arith.constant 0 : index
    %c0_21 = arith.constant 0 : index
    %c0_22 = arith.constant 0 : index
    %28 = vector.load %arg4[%c0_20, %c0_21, %c0_22] : memref<3x32x32xbf16, #tpu.memory_space<vmem>>, vector<1x32x32xbf16>
    %29 = vector.shape_cast %28 : vector<1x32x32xbf16> to vector<32x32xbf16>
    %cst_23 = arith.constant dense<0.000000e+00> : vector<32x64xf32>
    %30 = tpu.matmul %29, %27, %cst_23 {dimension_numbers = #tpu.dot_dimension_numbers<[1], [0], [0], [1], [0, 0, 1, 1], [], []>} : vector<32x32xbf16>, vector<32x64xbf16>, vector<32x64xf32> -> vector<32x64xf32>
    %c0_24 = arith.constant 0 : index
    %c0_25 = arith.constant 0 : index
    %c0_26 = arith.constant 0 : index
    %31 = vector.load %arg5[%c0_24, %c0_25, %c0_26] : memref<3x32x1xf32, #tpu.memory_space<vmem>>, vector<1x32x1xf32>
    %32 = vector.shape_cast %31 : vector<1x32x1xf32> to vector<32x1xf32>
    %33 = vector.broadcast %32 : vector<32x1xf32> to vector<32x64xf32>
    %34 = arith.addf %30, %33 : vector<32x64xf32>
    %35 = arith.addf %1, %34 : vector<32x64xf32>
    %cst_27 = arith.constant 0.000000e+00 : f32
    %36 = vector.broadcast %cst_27 : f32 to vector<32x64xf32>
    %37 = arith.maximumf %35, %36 : vector<32x64xf32>
    %38 = arith.truncf %37 : vector<32x64xf32> to vector<32x64xbf16>
    %cst_28 = arith.constant 0.000000e+00 : bf16
    %39 = vector.broadcast %cst_28 : bf16 to vector<32x2xbf16>
    %40 = vector.extract_strided_slice %38 {offsets = [0, 0], sizes = [32, 62], strides = [1, 1]} : vector<32x64xbf16> to vector<32x62xbf16>
    %41 = tpu.concatenate %39, %40 in 1 : vector<32x2xbf16>, vector<32x62xbf16> -> vector<32x64xbf16>
    %42 = vector.extract_strided_slice %38 {offsets = [0, 2], sizes = [32, 62], strides = [1, 1]} : vector<32x64xbf16> to vector<32x62xbf16>
    %43 = tpu.concatenate %42, %39 in 1 : vector<32x62xbf16>, vector<32x2xbf16> -> vector<32x64xbf16>
    %c1_29 = arith.constant 1 : index
    %c0_30 = arith.constant 0 : index
    %c0_31 = arith.constant 0 : index
    %c0_32 = arith.constant 0 : index
    %44 = vector.load %arg2[%c1_29, %c0_30, %c0_31, %c0_32] : memref<3x3x32x32xbf16, #tpu.memory_space<vmem>>, vector<1x1x32x32xbf16>
    %45 = vector.shape_cast %44 : vector<1x1x32x32xbf16> to vector<32x32xbf16>
    %cst_33 = arith.constant dense<0.000000e+00> : vector<32x64xf32>
    %46 = tpu.matmul %45, %41, %cst_33 {dimension_numbers = #tpu.dot_dimension_numbers<[1], [0], [0], [1], [0, 0, 1, 1], [], []>} : vector<32x32xbf16>, vector<32x64xbf16>, vector<32x64xf32> -> vector<32x64xf32>
    %c1_34 = arith.constant 1 : index
    %c1_35 = arith.constant 1 : index
    %c0_36 = arith.constant 0 : index
    %c0_37 = arith.constant 0 : index
    %47 = vector.load %arg2[%c1_34, %c1_35, %c0_36, %c0_37] : memref<3x3x32x32xbf16, #tpu.memory_space<vmem>>, vector<1x1x32x32xbf16>
    %48 = vector.shape_cast %47 : vector<1x1x32x32xbf16> to vector<32x32xbf16>
    %cst_38 = arith.constant dense<0.000000e+00> : vector<32x64xf32>
    %49 = tpu.matmul %48, %38, %cst_38 {dimension_numbers = #tpu.dot_dimension_numbers<[1], [0], [0], [1], [0, 0, 1, 1], [], []>} : vector<32x32xbf16>, vector<32x64xbf16>, vector<32x64xf32> -> vector<32x64xf32>
    %50 = arith.addf %46, %49 : vector<32x64xf32>
    %c1_39 = arith.constant 1 : index
    %c2_40 = arith.constant 2 : index
    %c0_41 = arith.constant 0 : index
    %c0_42 = arith.constant 0 : index
    %51 = vector.load %arg2[%c1_39, %c2_40, %c0_41, %c0_42] : memref<3x3x32x32xbf16, #tpu.memory_space<vmem>>, vector<1x1x32x32xbf16>
    %52 = vector.shape_cast %51 : vector<1x1x32x32xbf16> to vector<32x32xbf16>
    %cst_43 = arith.constant dense<0.000000e+00> : vector<32x64xf32>
    %53 = tpu.matmul %52, %43, %cst_43 {dimension_numbers = #tpu.dot_dimension_numbers<[1], [0], [0], [1], [0, 0, 1, 1], [], []>} : vector<32x32xbf16>, vector<32x64xbf16>, vector<32x64xf32> -> vector<32x64xf32>
    %54 = arith.addf %50, %53 : vector<32x64xf32>
    %c1_44 = arith.constant 1 : index
    %c0_45 = arith.constant 0 : index
    %c0_46 = arith.constant 0 : index
    %55 = vector.load %arg3[%c1_44, %c0_45, %c0_46] : memref<3x32x1xf32, #tpu.memory_space<vmem>>, vector<1x32x1xf32>
    %56 = vector.shape_cast %55 : vector<1x32x1xf32> to vector<32x1xf32>
    %57 = vector.broadcast %56 : vector<32x1xf32> to vector<32x64xf32>
    %58 = arith.addf %54, %57 : vector<32x64xf32>
    %cst_47 = arith.constant 0.000000e+00 : f32
    %59 = vector.broadcast %cst_47 : f32 to vector<32x64xf32>
    %60 = arith.maximumf %58, %59 : vector<32x64xf32>
    %61 = arith.truncf %60 : vector<32x64xf32> to vector<32x64xbf16>
    %c1_48 = arith.constant 1 : index
    %c0_49 = arith.constant 0 : index
    %c0_50 = arith.constant 0 : index
    %62 = vector.load %arg4[%c1_48, %c0_49, %c0_50] : memref<3x32x32xbf16, #tpu.memory_space<vmem>>, vector<1x32x32xbf16>
    %63 = vector.shape_cast %62 : vector<1x32x32xbf16> to vector<32x32xbf16>
    %cst_51 = arith.constant dense<0.000000e+00> : vector<32x64xf32>
    %64 = tpu.matmul %63, %61, %cst_51 {dimension_numbers = #tpu.dot_dimension_numbers<[1], [0], [0], [1], [0, 0, 1, 1], [], []>} : vector<32x32xbf16>, vector<32x64xbf16>, vector<32x64xf32> -> vector<32x64xf32>
    %c1_52 = arith.constant 1 : index
    %c0_53 = arith.constant 0 : index
    %c0_54 = arith.constant 0 : index
    %65 = vector.load %arg5[%c1_52, %c0_53, %c0_54] : memref<3x32x1xf32, #tpu.memory_space<vmem>>, vector<1x32x1xf32>
    %66 = vector.shape_cast %65 : vector<1x32x1xf32> to vector<32x1xf32>
    %67 = vector.broadcast %66 : vector<32x1xf32> to vector<32x64xf32>
    %68 = arith.addf %64, %67 : vector<32x64xf32>
    %69 = arith.addf %35, %68 : vector<32x64xf32>
    %cst_55 = arith.constant 0.000000e+00 : f32
    %70 = vector.broadcast %cst_55 : f32 to vector<32x64xf32>
    %71 = arith.maximumf %69, %70 : vector<32x64xf32>
    %72 = arith.truncf %71 : vector<32x64xf32> to vector<32x64xbf16>
    %cst_56 = arith.constant 0.000000e+00 : bf16
    %73 = vector.broadcast %cst_56 : bf16 to vector<32x1xbf16>
    %74 = vector.extract_strided_slice %72 {offsets = [0, 0], sizes = [32, 63], strides = [1, 1]} : vector<32x64xbf16> to vector<32x63xbf16>
    %75 = tpu.concatenate %73, %74 in 1 : vector<32x1xbf16>, vector<32x63xbf16> -> vector<32x64xbf16>
    %76 = vector.extract_strided_slice %72 {offsets = [0, 1], sizes = [32, 63], strides = [1, 1]} : vector<32x64xbf16> to vector<32x63xbf16>
    %77 = tpu.concatenate %76, %73 in 1 : vector<32x63xbf16>, vector<32x1xbf16> -> vector<32x64xbf16>
    %c2_57 = arith.constant 2 : index
    %c0_58 = arith.constant 0 : index
    %c0_59 = arith.constant 0 : index
    %c0_60 = arith.constant 0 : index
    %78 = vector.load %arg2[%c2_57, %c0_58, %c0_59, %c0_60] : memref<3x3x32x32xbf16, #tpu.memory_space<vmem>>, vector<1x1x32x32xbf16>
    %79 = vector.shape_cast %78 : vector<1x1x32x32xbf16> to vector<32x32xbf16>
    %cst_61 = arith.constant dense<0.000000e+00> : vector<32x64xf32>
    %80 = tpu.matmul %79, %75, %cst_61 {dimension_numbers = #tpu.dot_dimension_numbers<[1], [0], [0], [1], [0, 0, 1, 1], [], []>} : vector<32x32xbf16>, vector<32x64xbf16>, vector<32x64xf32> -> vector<32x64xf32>
    %c2_62 = arith.constant 2 : index
    %c1_63 = arith.constant 1 : index
    %c0_64 = arith.constant 0 : index
    %c0_65 = arith.constant 0 : index
    %81 = vector.load %arg2[%c2_62, %c1_63, %c0_64, %c0_65] : memref<3x3x32x32xbf16, #tpu.memory_space<vmem>>, vector<1x1x32x32xbf16>
    %82 = vector.shape_cast %81 : vector<1x1x32x32xbf16> to vector<32x32xbf16>
    %cst_66 = arith.constant dense<0.000000e+00> : vector<32x64xf32>
    %83 = tpu.matmul %82, %72, %cst_66 {dimension_numbers = #tpu.dot_dimension_numbers<[1], [0], [0], [1], [0, 0, 1, 1], [], []>} : vector<32x32xbf16>, vector<32x64xbf16>, vector<32x64xf32> -> vector<32x64xf32>
    %84 = arith.addf %80, %83 : vector<32x64xf32>
    %c2_67 = arith.constant 2 : index
    %c2_68 = arith.constant 2 : index
    %c0_69 = arith.constant 0 : index
    %c0_70 = arith.constant 0 : index
    %85 = vector.load %arg2[%c2_67, %c2_68, %c0_69, %c0_70] : memref<3x3x32x32xbf16, #tpu.memory_space<vmem>>, vector<1x1x32x32xbf16>
    %86 = vector.shape_cast %85 : vector<1x1x32x32xbf16> to vector<32x32xbf16>
    %cst_71 = arith.constant dense<0.000000e+00> : vector<32x64xf32>
    %87 = tpu.matmul %86, %77, %cst_71 {dimension_numbers = #tpu.dot_dimension_numbers<[1], [0], [0], [1], [0, 0, 1, 1], [], []>} : vector<32x32xbf16>, vector<32x64xbf16>, vector<32x64xf32> -> vector<32x64xf32>
    %88 = arith.addf %84, %87 : vector<32x64xf32>
    %c2_72 = arith.constant 2 : index
    %c0_73 = arith.constant 0 : index
    %c0_74 = arith.constant 0 : index
    %89 = vector.load %arg3[%c2_72, %c0_73, %c0_74] : memref<3x32x1xf32, #tpu.memory_space<vmem>>, vector<1x32x1xf32>
    %90 = vector.shape_cast %89 : vector<1x32x1xf32> to vector<32x1xf32>
    %91 = vector.broadcast %90 : vector<32x1xf32> to vector<32x64xf32>
    %92 = arith.addf %88, %91 : vector<32x64xf32>
    %cst_75 = arith.constant 0.000000e+00 : f32
    %93 = vector.broadcast %cst_75 : f32 to vector<32x64xf32>
    %94 = arith.maximumf %92, %93 : vector<32x64xf32>
    %95 = arith.truncf %94 : vector<32x64xf32> to vector<32x64xbf16>
    %c2_76 = arith.constant 2 : index
    %c0_77 = arith.constant 0 : index
    %c0_78 = arith.constant 0 : index
    %96 = vector.load %arg4[%c2_76, %c0_77, %c0_78] : memref<3x32x32xbf16, #tpu.memory_space<vmem>>, vector<1x32x32xbf16>
    %97 = vector.shape_cast %96 : vector<1x32x32xbf16> to vector<32x32xbf16>
    %cst_79 = arith.constant dense<0.000000e+00> : vector<32x64xf32>
    %98 = tpu.matmul %97, %95, %cst_79 {dimension_numbers = #tpu.dot_dimension_numbers<[1], [0], [0], [1], [0, 0, 1, 1], [], []>} : vector<32x32xbf16>, vector<32x64xbf16>, vector<32x64xf32> -> vector<32x64xf32>
    %c2_80 = arith.constant 2 : index
    %c0_81 = arith.constant 0 : index
    %c0_82 = arith.constant 0 : index
    %99 = vector.load %arg5[%c2_80, %c0_81, %c0_82] : memref<3x32x1xf32, #tpu.memory_space<vmem>>, vector<1x32x1xf32>
    %100 = vector.shape_cast %99 : vector<1x32x1xf32> to vector<32x1xf32>
    %101 = vector.broadcast %100 : vector<32x1xf32> to vector<32x64xf32>
    %102 = arith.addf %98, %101 : vector<32x64xf32>
    %103 = arith.addf %69, %102 : vector<32x64xf32>
    %c0_83 = arith.constant 0 : index
    %c0_84 = arith.constant 0 : index
    %c0_85 = arith.constant 0 : index
    %104 = vector.load %arg6[%c0_83, %c0_84, %c0_85] : memref<2x32x64xf32, #tpu.memory_space<vmem>>, vector<1x32x64xf32>
    %105 = vector.shape_cast %104 : vector<1x32x64xf32> to vector<32x64xf32>
    %106 = vector.shape_cast %103 : vector<32x64xf32> to vector<1x32x64xf32>
    tpu.vector_store %arg6[%c0_83, %c0_84, %c0_85], %106 {strides = array<i32>} : memref<2x32x64xf32, #tpu.memory_space<vmem>>, vector<1x32x64xf32>,
    %c1_86 = arith.constant 1 : index
    %c0_87 = arith.constant 0 : index
    %c0_88 = arith.constant 0 : index
    %107 = vector.load %arg1[%c1_86, %c0_87, %c0_88] : memref<2x32x64xf32, #tpu.memory_space<vmem>>, vector<1x32x64xf32>
    %108 = vector.shape_cast %107 : vector<1x32x64xf32> to vector<32x64xf32>
    %cst_89 = arith.constant 0.000000e+00 : f32
    %109 = vector.broadcast %cst_89 : f32 to vector<32x64xf32>
    %110 = arith.maximumf %108, %109 : vector<32x64xf32>
    %111 = arith.truncf %110 : vector<32x64xf32> to vector<32x64xbf16>
    %cst_90 = arith.constant 0.000000e+00 : bf16
    %112 = vector.broadcast %cst_90 : bf16 to vector<32x4xbf16>
    %113 = vector.extract_strided_slice %111 {offsets = [0, 0], sizes = [32, 60], strides = [1, 1]} : vector<32x64xbf16> to vector<32x60xbf16>
    %114 = tpu.concatenate %112, %113 in 1 : vector<32x4xbf16>, vector<32x60xbf16> -> vector<32x64xbf16>
    %115 = vector.extract_strided_slice %111 {offsets = [0, 4], sizes = [32, 60], strides = [1, 1]} : vector<32x64xbf16> to vector<32x60xbf16>
    %116 = tpu.concatenate %115, %112 in 1 : vector<32x60xbf16>, vector<32x4xbf16> -> vector<32x64xbf16>
    %c0_91 = arith.constant 0 : index
    %c0_92 = arith.constant 0 : index
    %c0_93 = arith.constant 0 : index
    %c0_94 = arith.constant 0 : index
    %117 = vector.load %arg2[%c0_91, %c0_92, %c0_93, %c0_94] : memref<3x3x32x32xbf16, #tpu.memory_space<vmem>>, vector<1x1x32x32xbf16>
    %118 = vector.shape_cast %117 : vector<1x1x32x32xbf16> to vector<32x32xbf16>
    %cst_95 = arith.constant dense<0.000000e+00> : vector<32x64xf32>
    %119 = tpu.matmul %118, %114, %cst_95 {dimension_numbers = #tpu.dot_dimension_numbers<[1], [0], [0], [1], [0, 0, 1, 1], [], []>} : vector<32x32xbf16>, vector<32x64xbf16>, vector<32x64xf32> -> vector<32x64xf32>
    %c0_96 = arith.constant 0 : index
    %c1_97 = arith.constant 1 : index
    %c0_98 = arith.constant 0 : index
    %c0_99 = arith.constant 0 : index
    %120 = vector.load %arg2[%c0_96, %c1_97, %c0_98, %c0_99] : memref<3x3x32x32xbf16, #tpu.memory_space<vmem>>, vector<1x1x32x32xbf16>
    %121 = vector.shape_cast %120 : vector<1x1x32x32xbf16> to vector<32x32xbf16>
    %cst_100 = arith.constant dense<0.000000e+00> : vector<32x64xf32>
    %122 = tpu.matmul %121, %111, %cst_100 {dimension_numbers = #tpu.dot_dimension_numbers<[1], [0], [0], [1], [0, 0, 1, 1], [], []>} : vector<32x32xbf16>, vector<32x64xbf16>, vector<32x64xf32> -> vector<32x64xf32>
    %123 = arith.addf %119, %122 : vector<32x64xf32>
    %c0_101 = arith.constant 0 : index
    %c2_102 = arith.constant 2 : index
    %c0_103 = arith.constant 0 : index
    %c0_104 = arith.constant 0 : index
    %124 = vector.load %arg2[%c0_101, %c2_102, %c0_103, %c0_104] : memref<3x3x32x32xbf16, #tpu.memory_space<vmem>>, vector<1x1x32x32xbf16>
    %125 = vector.shape_cast %124 : vector<1x1x32x32xbf16> to vector<32x32xbf16>
    %cst_105 = arith.constant dense<0.000000e+00> : vector<32x64xf32>
    %126 = tpu.matmul %125, %116, %cst_105 {dimension_numbers = #tpu.dot_dimension_numbers<[1], [0], [0], [1], [0, 0, 1, 1], [], []>} : vector<32x32xbf16>, vector<32x64xbf16>, vector<32x64xf32> -> vector<32x64xf32>
    %127 = arith.addf %123, %126 : vector<32x64xf32>
    %c0_106 = arith.constant 0 : index
    %c0_107 = arith.constant 0 : index
    %c0_108 = arith.constant 0 : index
    %128 = vector.load %arg3[%c0_106, %c0_107, %c0_108] : memref<3x32x1xf32, #tpu.memory_space<vmem>>, vector<1x32x1xf32>
    %129 = vector.shape_cast %128 : vector<1x32x1xf32> to vector<32x1xf32>
    %130 = vector.broadcast %129 : vector<32x1xf32> to vector<32x64xf32>
    %131 = arith.addf %127, %130 : vector<32x64xf32>
    %cst_109 = arith.constant 0.000000e+00 : f32
    %132 = vector.broadcast %cst_109 : f32 to vector<32x64xf32>
    %133 = arith.maximumf %131, %132 : vector<32x64xf32>
    %134 = arith.truncf %133 : vector<32x64xf32> to vector<32x64xbf16>
    %c0_110 = arith.constant 0 : index
    %c0_111 = arith.constant 0 : index
    %c0_112 = arith.constant 0 : index
    %135 = vector.load %arg4[%c0_110, %c0_111, %c0_112] : memref<3x32x32xbf16, #tpu.memory_space<vmem>>, vector<1x32x32xbf16>
    %136 = vector.shape_cast %135 : vector<1x32x32xbf16> to vector<32x32xbf16>
    %cst_113 = arith.constant dense<0.000000e+00> : vector<32x64xf32>
    %137 = tpu.matmul %136, %134, %cst_113 {dimension_numbers = #tpu.dot_dimension_numbers<[1], [0], [0], [1], [0, 0, 1, 1], [], []>} : vector<32x32xbf16>, vector<32x64xbf16>, vector<32x64xf32> -> vector<32x64xf32>
    %c0_114 = arith.constant 0 : index
    %c0_115 = arith.constant 0 : index
    %c0_116 = arith.constant 0 : index
    %138 = vector.load %arg5[%c0_114, %c0_115, %c0_116] : memref<3x32x1xf32, #tpu.memory_space<vmem>>, vector<1x32x1xf32>
    %139 = vector.shape_cast %138 : vector<1x32x1xf32> to vector<32x1xf32>
    %140 = vector.broadcast %139 : vector<32x1xf32> to vector<32x64xf32>
    %141 = arith.addf %137, %140 : vector<32x64xf32>
    %142 = arith.addf %108, %141 : vector<32x64xf32>
    %cst_117 = arith.constant 0.000000e+00 : f32
    %143 = vector.broadcast %cst_117 : f32 to vector<32x64xf32>
    %144 = arith.maximumf %142, %143 : vector<32x64xf32>
    %145 = arith.truncf %144 : vector<32x64xf32> to vector<32x64xbf16>
    %cst_118 = arith.constant 0.000000e+00 : bf16
    %146 = vector.broadcast %cst_118 : bf16 to vector<32x2xbf16>
    %147 = vector.extract_strided_slice %145 {offsets = [0, 0], sizes = [32, 62], strides = [1, 1]} : vector<32x64xbf16> to vector<32x62xbf16>
    %148 = tpu.concatenate %146, %147 in 1 : vector<32x2xbf16>, vector<32x62xbf16> -> vector<32x64xbf16>
    %149 = vector.extract_strided_slice %145 {offsets = [0, 2], sizes = [32, 62], strides = [1, 1]} : vector<32x64xbf16> to vector<32x62xbf16>
    %150 = tpu.concatenate %149, %146 in 1 : vector<32x62xbf16>, vector<32x2xbf16> -> vector<32x64xbf16>
    %c1_119 = arith.constant 1 : index
    %c0_120 = arith.constant 0 : index
    %c0_121 = arith.constant 0 : index
    %c0_122 = arith.constant 0 : index
    %151 = vector.load %arg2[%c1_119, %c0_120, %c0_121, %c0_122] : memref<3x3x32x32xbf16, #tpu.memory_space<vmem>>, vector<1x1x32x32xbf16>
    %152 = vector.shape_cast %151 : vector<1x1x32x32xbf16> to vector<32x32xbf16>
    %cst_123 = arith.constant dense<0.000000e+00> : vector<32x64xf32>
    %153 = tpu.matmul %152, %148, %cst_123 {dimension_numbers = #tpu.dot_dimension_numbers<[1], [0], [0], [1], [0, 0, 1, 1], [], []>} : vector<32x32xbf16>, vector<32x64xbf16>, vector<32x64xf32> -> vector<32x64xf32>
    %c1_124 = arith.constant 1 : index
    %c1_125 = arith.constant 1 : index
    %c0_126 = arith.constant 0 : index
    %c0_127 = arith.constant 0 : index
    %154 = vector.load %arg2[%c1_124, %c1_125, %c0_126, %c0_127] : memref<3x3x32x32xbf16, #tpu.memory_space<vmem>>, vector<1x1x32x32xbf16>
    %155 = vector.shape_cast %154 : vector<1x1x32x32xbf16> to vector<32x32xbf16>
    %cst_128 = arith.constant dense<0.000000e+00> : vector<32x64xf32>
    %156 = tpu.matmul %155, %145, %cst_128 {dimension_numbers = #tpu.dot_dimension_numbers<[1], [0], [0], [1], [0, 0, 1, 1], [], []>} : vector<32x32xbf16>, vector<32x64xbf16>, vector<32x64xf32> -> vector<32x64xf32>
    %157 = arith.addf %153, %156 : vector<32x64xf32>
    %c1_129 = arith.constant 1 : index
    %c2_130 = arith.constant 2 : index
    %c0_131 = arith.constant 0 : index
    %c0_132 = arith.constant 0 : index
    %158 = vector.load %arg2[%c1_129, %c2_130, %c0_131, %c0_132] : memref<3x3x32x32xbf16, #tpu.memory_space<vmem>>, vector<1x1x32x32xbf16>
    %159 = vector.shape_cast %158 : vector<1x1x32x32xbf16> to vector<32x32xbf16>
    %cst_133 = arith.constant dense<0.000000e+00> : vector<32x64xf32>
    %160 = tpu.matmul %159, %150, %cst_133 {dimension_numbers = #tpu.dot_dimension_numbers<[1], [0], [0], [1], [0, 0, 1, 1], [], []>} : vector<32x32xbf16>, vector<32x64xbf16>, vector<32x64xf32> -> vector<32x64xf32>
    %161 = arith.addf %157, %160 : vector<32x64xf32>
    %c1_134 = arith.constant 1 : index
    %c0_135 = arith.constant 0 : index
    %c0_136 = arith.constant 0 : index
    %162 = vector.load %arg3[%c1_134, %c0_135, %c0_136] : memref<3x32x1xf32, #tpu.memory_space<vmem>>, vector<1x32x1xf32>
    %163 = vector.shape_cast %162 : vector<1x32x1xf32> to vector<32x1xf32>
    %164 = vector.broadcast %163 : vector<32x1xf32> to vector<32x64xf32>
    %165 = arith.addf %161, %164 : vector<32x64xf32>
    %cst_137 = arith.constant 0.000000e+00 : f32
    %166 = vector.broadcast %cst_137 : f32 to vector<32x64xf32>
    %167 = arith.maximumf %165, %166 : vector<32x64xf32>
    %168 = arith.truncf %167 : vector<32x64xf32> to vector<32x64xbf16>
    %c1_138 = arith.constant 1 : index
    %c0_139 = arith.constant 0 : index
    %c0_140 = arith.constant 0 : index
    %169 = vector.load %arg4[%c1_138, %c0_139, %c0_140] : memref<3x32x32xbf16, #tpu.memory_space<vmem>>, vector<1x32x32xbf16>
    %170 = vector.shape_cast %169 : vector<1x32x32xbf16> to vector<32x32xbf16>
    %cst_141 = arith.constant dense<0.000000e+00> : vector<32x64xf32>
    %171 = tpu.matmul %170, %168, %cst_141 {dimension_numbers = #tpu.dot_dimension_numbers<[1], [0], [0], [1], [0, 0, 1, 1], [], []>} : vector<32x32xbf16>, vector<32x64xbf16>, vector<32x64xf32> -> vector<32x64xf32>
    %c1_142 = arith.constant 1 : index
    %c0_143 = arith.constant 0 : index
    %c0_144 = arith.constant 0 : index
    %172 = vector.load %arg5[%c1_142, %c0_143, %c0_144] : memref<3x32x1xf32, #tpu.memory_space<vmem>>, vector<1x32x1xf32>
    %173 = vector.shape_cast %172 : vector<1x32x1xf32> to vector<32x1xf32>
    %174 = vector.broadcast %173 : vector<32x1xf32> to vector<32x64xf32>
    %175 = arith.addf %171, %174 : vector<32x64xf32>
    %176 = arith.addf %142, %175 : vector<32x64xf32>
    %cst_145 = arith.constant 0.000000e+00 : f32
    %177 = vector.broadcast %cst_145 : f32 to vector<32x64xf32>
    %178 = arith.maximumf %176, %177 : vector<32x64xf32>
    %179 = arith.truncf %178 : vector<32x64xf32> to vector<32x64xbf16>
    %cst_146 = arith.constant 0.000000e+00 : bf16
    %180 = vector.broadcast %cst_146 : bf16 to vector<32x1xbf16>
    %181 = vector.extract_strided_slice %179 {offsets = [0, 0], sizes = [32, 63], strides = [1, 1]} : vector<32x64xbf16> to vector<32x63xbf16>
    %182 = tpu.concatenate %180, %181 in 1 : vector<32x1xbf16>, vector<32x63xbf16> -> vector<32x64xbf16>
    %183 = vector.extract_strided_slice %179 {offsets = [0, 1], sizes = [32, 63], strides = [1, 1]} : vector<32x64xbf16> to vector<32x63xbf16>
    %184 = tpu.concatenate %183, %180 in 1 : vector<32x63xbf16>, vector<32x1xbf16> -> vector<32x64xbf16>
    %c2_147 = arith.constant 2 : index
    %c0_148 = arith.constant 0 : index
    %c0_149 = arith.constant 0 : index
    %c0_150 = arith.constant 0 : index
    %185 = vector.load %arg2[%c2_147, %c0_148, %c0_149, %c0_150] : memref<3x3x32x32xbf16, #tpu.memory_space<vmem>>, vector<1x1x32x32xbf16>
    %186 = vector.shape_cast %185 : vector<1x1x32x32xbf16> to vector<32x32xbf16>
    %cst_151 = arith.constant dense<0.000000e+00> : vector<32x64xf32>
    %187 = tpu.matmul %186, %182, %cst_151 {dimension_numbers = #tpu.dot_dimension_numbers<[1], [0], [0], [1], [0, 0, 1, 1], [], []>} : vector<32x32xbf16>, vector<32x64xbf16>, vector<32x64xf32> -> vector<32x64xf32>
    %c2_152 = arith.constant 2 : index
    %c1_153 = arith.constant 1 : index
    %c0_154 = arith.constant 0 : index
    %c0_155 = arith.constant 0 : index
    %188 = vector.load %arg2[%c2_152, %c1_153, %c0_154, %c0_155] : memref<3x3x32x32xbf16, #tpu.memory_space<vmem>>, vector<1x1x32x32xbf16>
    %189 = vector.shape_cast %188 : vector<1x1x32x32xbf16> to vector<32x32xbf16>
    %cst_156 = arith.constant dense<0.000000e+00> : vector<32x64xf32>
    %190 = tpu.matmul %189, %179, %cst_156 {dimension_numbers = #tpu.dot_dimension_numbers<[1], [0], [0], [1], [0, 0, 1, 1], [], []>} : vector<32x32xbf16>, vector<32x64xbf16>, vector<32x64xf32> -> vector<32x64xf32>
    %191 = arith.addf %187, %190 : vector<32x64xf32>
    %c2_157 = arith.constant 2 : index
    %c2_158 = arith.constant 2 : index
    %c0_159 = arith.constant 0 : index
    %c0_160 = arith.constant 0 : index
    %192 = vector.load %arg2[%c2_157, %c2_158, %c0_159, %c0_160] : memref<3x3x32x32xbf16, #tpu.memory_space<vmem>>, vector<1x1x32x32xbf16>
    %193 = vector.shape_cast %192 : vector<1x1x32x32xbf16> to vector<32x32xbf16>
    %cst_161 = arith.constant dense<0.000000e+00> : vector<32x64xf32>
    %194 = tpu.matmul %193, %184, %cst_161 {dimension_numbers = #tpu.dot_dimension_numbers<[1], [0], [0], [1], [0, 0, 1, 1], [], []>} : vector<32x32xbf16>, vector<32x64xbf16>, vector<32x64xf32> -> vector<32x64xf32>
    %195 = arith.addf %191, %194 : vector<32x64xf32>
    %c2_162 = arith.constant 2 : index
    %c0_163 = arith.constant 0 : index
    %c0_164 = arith.constant 0 : index
    %196 = vector.load %arg3[%c2_162, %c0_163, %c0_164] : memref<3x32x1xf32, #tpu.memory_space<vmem>>, vector<1x32x1xf32>
    %197 = vector.shape_cast %196 : vector<1x32x1xf32> to vector<32x1xf32>
    %198 = vector.broadcast %197 : vector<32x1xf32> to vector<32x64xf32>
    %199 = arith.addf %195, %198 : vector<32x64xf32>
    %cst_165 = arith.constant 0.000000e+00 : f32
    %200 = vector.broadcast %cst_165 : f32 to vector<32x64xf32>
    %201 = arith.maximumf %199, %200 : vector<32x64xf32>
    %202 = arith.truncf %201 : vector<32x64xf32> to vector<32x64xbf16>
    %c2_166 = arith.constant 2 : index
    %c0_167 = arith.constant 0 : index
    %c0_168 = arith.constant 0 : index
    %203 = vector.load %arg4[%c2_166, %c0_167, %c0_168] : memref<3x32x32xbf16, #tpu.memory_space<vmem>>, vector<1x32x32xbf16>
    %204 = vector.shape_cast %203 : vector<1x32x32xbf16> to vector<32x32xbf16>
    %cst_169 = arith.constant dense<0.000000e+00> : vector<32x64xf32>
    %205 = tpu.matmul %204, %202, %cst_169 {dimension_numbers = #tpu.dot_dimension_numbers<[1], [0], [0], [1], [0, 0, 1, 1], [], []>} : vector<32x32xbf16>, vector<32x64xbf16>, vector<32x64xf32> -> vector<32x64xf32>
    %c2_170 = arith.constant 2 : index
    %c0_171 = arith.constant 0 : index
    %c0_172 = arith.constant 0 : index
    %206 = vector.load %arg5[%c2_170, %c0_171, %c0_172] : memref<3x32x1xf32, #tpu.memory_space<vmem>>, vector<1x32x1xf32>
    %207 = vector.shape_cast %206 : vector<1x32x1xf32> to vector<32x1xf32>
    %208 = vector.broadcast %207 : vector<32x1xf32> to vector<32x64xf32>
    %209 = arith.addf %205, %208 : vector<32x64xf32>
    %210 = arith.addf %176, %209 : vector<32x64xf32>
    %c1_173 = arith.constant 1 : index
    %c0_174 = arith.constant 0 : index
    %c0_175 = arith.constant 0 : index
    %211 = vector.load %arg6[%c1_173, %c0_174, %c0_175] : memref<2x32x64xf32, #tpu.memory_space<vmem>>, vector<1x32x64xf32>
    %212 = vector.shape_cast %211 : vector<1x32x64xf32> to vector<32x64xf32>
    %213 = vector.shape_cast %210 : vector<32x64xf32> to vector<1x32x64xf32>
    tpu.vector_store %arg6[%c1_173, %c0_174, %c0_175], %213 {strides = array<i32>} : memref<2x32x64xf32, #tpu.memory_space<vmem>>, vector<1x32x64xf32>,
    return
  }
  func.func @transform_0(%arg0: i32) -> (i32, i32, i32) {
    %c0_i32 = arith.constant 0 : i32
    %c0_i32_0 = arith.constant 0 : i32
    %c0_i32_1 = arith.constant 0 : i32
    return %arg0, %c0_i32, %c0_i32_0 : i32, i32, i32
  }
  func.func @transform_1(%arg0: i32) -> (i32, i32, i32, i32) {
    %c0_i32 = arith.constant 0 : i32
    %c0_i32_0 = arith.constant 0 : i32
    %c0_i32_1 = arith.constant 0 : i32
    %c0_i32_2 = arith.constant 0 : i32
    %c0_i32_3 = arith.constant 0 : i32
    return %c0_i32, %c0_i32_0, %c0_i32_1, %c0_i32_2 : i32, i32, i32, i32
  }
  func.func @transform_2(%arg0: i32) -> (i32, i32, i32) {
    %c0_i32 = arith.constant 0 : i32
    %c0_i32_0 = arith.constant 0 : i32
    %c0_i32_1 = arith.constant 0 : i32
    %c0_i32_2 = arith.constant 0 : i32
    return %c0_i32, %c0_i32_0, %c0_i32_1 : i32, i32, i32
  }
  func.func @transform_3(%arg0: i32) -> (i32, i32, i32) {
    %c0_i32 = arith.constant 0 : i32
    %c0_i32_0 = arith.constant 0 : i32
    %c0_i32_1 = arith.constant 0 : i32
    %c0_i32_2 = arith.constant 0 : i32
    return %c0_i32, %c0_i32_0, %c0_i32_1 : i32, i32, i32
  }
  func.func @transform_4(%arg0: i32) -> (i32, i32, i32) {
    %c0_i32 = arith.constant 0 : i32
    %c0_i32_0 = arith.constant 0 : i32
    %c0_i32_1 = arith.constant 0 : i32
    %c0_i32_2 = arith.constant 0 : i32
    return %c0_i32, %c0_i32_0, %c0_i32_1 : i32, i32, i32
  }
  func.func @transform_5(%arg0: i32) -> (i32, i32, i32) {
    %c0_i32 = arith.constant 0 : i32
    %c0_i32_0 = arith.constant 0 : i32
    %c0_i32_1 = arith.constant 0 : i32
    return %arg0, %c0_i32, %c0_i32_0 : i32, i32, i32
  }
}

</mosaic_0001>

<llo_original>
// kernel: tpu_custom_call.1
$region0: #{tpu_custom_call.1}
  #allocation0 [shape = 'u32[]', space=smem, size = 0x4, offset = 0x4, fixed_abs, tag = 'smem constant byte address 0x4 - core index']
  #allocation1 [shape = 'u32[144,128]{1,0:T(1,128)}', space=vmem, size = 0x12000, scoped, tag = 'internal scratch']
  %s0 = inlined_call_operand.hbm [shape: f32[2,32,64], index: 0, kind: input, shape index: {}]
  %s1 = inlined_call_operand.vmem [shape: bf16[3,3,32,32], index: 1, kind: input, shape index: {}]
  %s2 = inlined_call_operand.vmem [shape: f32[3,32,1], index: 2, kind: input, shape index: {}]
  %s3 = inlined_call_operand.vmem [shape: bf16[3,32,32], index: 3, kind: input, shape index: {}]
  %s4 = inlined_call_operand.vmem [shape: f32[3,32,1], index: 4, kind: input, shape index: {}]
  %s5 = inlined_call_operand.hbm [shape: f32[2,32,64], index: 5, kind: output, shape index: {}]
  %s6 = sld [smem:[#allocation0]]
  $region34: #{tpu_custom_call.1} parent=0
    _
  %s8 = ssub.s32 1, %s6
  %s9 = scalar_select 0, %s8, %s6
  $region1: #{tpu_custom_call.1} parent=0
    #allocation2 [shape = 'u8[32768]{0}', space=vmem, size = 0x8000, scoped, tag = 'input window, operand 0, single buffered']
    #allocation3 [shape = 's32[1]{0}', space=sflag, size = 0x4, scoped, tag = 'scoped memory for tpu_custom_call.1']
    #allocation4 [shape = 's32[1]{0}', space=sflag, size = 0x4, scoped, tag = 'scoped memory for tpu_custom_call.1']
    #allocation5 [shape = 'u8[32768]{0}', space=vmem, size = 0x8000, scoped, tag = 'output window, operand 0, single buffered']
    %10 = vsyncpa [#allocation3], 0
    %11 = vsyncpa [#allocation4], 0
    // Predicated region
    $region2: #{tpu_custom_call.1} parent=1 // pred_check
      _
    $region3: #{tpu_custom_call.1} parent=1 // pred_check_branch
      %13 = sbr.rel (0) target = $region5
    $region4: #{tpu_custom_call.1} parent=1 // pred_region
      %s15 = ssub.s32 1024, 1024
      %16 = vsyncadd [#allocation3], %s15
      %s17 = sshll.u32 [#allocation2], 4
      %s18 = int_to_ptr.vmem [resolvable:$true] %s17
      %23 = dma.hbm_to_vmem [thread:$0]  %s0, 1024, %s18, [#allocation3], 128, 128, 8
    $region5: #{tpu_custom_call.1} parent=1 // pred_fallthru
      _
    // Predicated region
    $region6: #{tpu_custom_call.1} parent=1 // pred_check
      _
    $region7: #{tpu_custom_call.1} parent=1 // pred_check_branch
      %25 = sbr.rel (0) target = $region9
    $region8: #{tpu_custom_call.1} parent=1 // pred_region
      _
    $region9: #{tpu_custom_call.1} parent=1 // pred_fallthru
      _
    // Predicated region
    $region10: #{tpu_custom_call.1} parent=1 // pred_check
      _
    $region11: #{tpu_custom_call.1} parent=1 // pred_check_branch
      %27 = sbr.rel (0) target = $region13
    $region12: #{tpu_custom_call.1} parent=1 // pred_region
      _
    $region13: #{tpu_custom_call.1} parent=1 // pred_fallthru
      _
    // Predicated region
    $region14: #{tpu_custom_call.1} parent=1 // pred_check
      _
    $region15: #{tpu_custom_call.1} parent=1 // pred_check_branch
      %29 = sbr.rel (0) target = $region17
    $region16: #{tpu_custom_call.1} parent=1 // pred_region
      _
    $region17: #{tpu_custom_call.1} parent=1 // pred_fallthru
      _
    // Predicated region
    $region18: #{tpu_custom_call.1} parent=1 // pred_check
      _
    $region19: #{tpu_custom_call.1} parent=1 // pred_check_branch
      %31 = sbr.rel (0) target = $region21
    $region20: #{tpu_custom_call.1} parent=1 // pred_region
      _
    $region21: #{tpu_custom_call.1} parent=1 // pred_fallthru
      _
    // Predicated region
    $region22: #{tpu_custom_call.1} parent=1 // pred_check
      _
    $region23: #{tpu_custom_call.1} parent=1 // pred_check_branch
      %33 = sbr.rel (0) target = $region25
    $region24: #{tpu_custom_call.1} parent=1 // pred_region
      %34 = dma.done [#allocation3], 1024
    $region25: #{tpu_custom_call.1} parent=1 // pred_fallthru
      _
    %v36 = vld [vmem:[#allocation2] sm:$0xff]
    %v37 = vld [vmem:[#allocation2 + $0x8] sm:$0xff]
    %v38 = vld [vmem:[#allocation2 + $0x10] sm:$0xff]
    %v39 = vld [vmem:[#allocation2 + $0x18] sm:$0xff]
    %v40 = vmax.f32 %v36, 0.0
    %v41 = vmax.f32 %v37, 0.0
    %v42 = vmax.f32 %v38, 0.0
    %v43 = vmax.f32 %v39, 0.0
    %v44 = vpack.c.bf16 %v41, %v40
    %v45 = vpack.c.bf16 %v43, %v42
    %48 = vrot.lane.b32.xlu0 %v44, 4
    %v49 = vpop.permute.xlu0 %48
    %50 = vrot.lane.b32.xlu0 %v45, 4
    %v51 = vpop.permute.xlu0 %50
    %vm52 = vcmask 31744
    %v55 = vsel %vm52, 0, %v49
    %v58 = vsel %vm52, 0, %v51
    %60 = vrot.lane.b32.xlu0 %v44, 124
    %v61 = vpop.permute.xlu0 %60
    %62 = vrot.lane.b32.xlu0 %v45, 124
    %v63 = vpop.permute.xlu0 %62
    %vm64 = vcmask 490496
    %v66 = vsel %vm64, %v61, 0
    %v69 = vsel %vm64, %v63, 0
    %v71 = vld [vmem:[%s1] sm:$0xf]
    %v72 = vld [vmem:[%s1 + $0x4] sm:$0xf]
    %v73 = vld [vmem:[%s1 + $0x8] sm:$0xf]
    %v74 = vld [vmem:[%s1 + $0xc] sm:$0xf]
    %s75 = scalar_lea.vmem %s1, 16
    %v76 = vld [vmem:[%s75] sm:$0xf]
    %v77 = vld [vmem:[%s75 + $0x4] sm:$0xf]
    %v78 = vld [vmem:[%s75 + $0x8] sm:$0xf]
    %v79 = vld [vmem:[%s75 + $0xc] sm:$0xf]
    %v84 = vunpack.c.l.b16 %v76
    %v85 = vunpack.c.l.b16 %v77
    %v86 = vunpack.c.l.b16 %v78
    %v87 = vunpack.c.l.b16 %v79
    %v88 = vpack.c.b16 %v85, %v84
    %v89 = vpack.c.b16 %v87, %v86
    %vm90 = vcmask 261120
    %v92 = vsel %vm90, %v88, 0
    %v95 = vsel %vm90, %v89, 0
    %97 = vmatprep.subr.bf16.mxu0 0
    %98 = vmatpush1.bf16.msra.mxu0 %v44
    %99 = vmatprep.subr.bf16.mxu0 0
    %100 = vmatpush1.bf16.msra.mxu0 %v45
    %101 = vmatprep.subr.bf16.mxu0 0
    %102 = vmatpush1.bf16.msra.mxu0 0
    %103 = vmatprep.subr.bf16.mxu0 0
    %104 = vmatpush1.bf16.msra.mxu0 0
    %105 = vmatprep.subr.bf16.mxu0 0
    %106 = vmatpush1.bf16.msra.mxu0 0
    %107 = vmatprep.subr.bf16.mxu0 0
    %108 = vmatpush1.bf16.msra.mxu0 0
    %109 = vmatprep.subr.bf16.mxu0 0
    %110 = vmatpush1.bf16.msra.mxu0 0
    %111 = vmatprep.subr.bf16.mxu0 0
    %112 = vmatpush1.bf16.msra.mxu0 0
    %113 = vmatprep.subr.bf16.mxu0 0
    %114 = vmatpush1.bf16.msra.mxu0 0
    %115 = vmatprep.subr.bf16.mxu0 0
    %116 = vmatpush1.bf16.msra.mxu0 0
    %117 = vmatprep.subr.bf16.mxu0 0
    %118 = vmatpush1.bf16.msra.mxu0 0
    %119 = vmatprep.subr.bf16.mxu0 0
    %120 = vmatpush1.bf16.msra.mxu0 0
    %121 = vmatprep.subr.bf16.mxu0 0
    %122 = vmatpush1.bf16.msra.mxu0 0
    %123 = vmatprep.subr.bf16.mxu0 0
    %124 = vmatpush1.bf16.msra.mxu0 0
    %125 = vmatprep.subr.bf16.mxu0 0
    %126 = vmatpush1.bf16.msra.mxu0 0
    %127 = vmatprep.subr.bf16.mxu0 0
    %128 = vmatpush1.bf16.msra.mxu0 0
    %129 = vmatprep.mubr.bf16.mxu0 0
    %130 = vmatmul.mubr.bf16.gmra.mrb[0].mxu0 %v92
    %v131 = vpop.f32.mrb[0].mxu0
    %v132 = vadd.f32 0.0, %v131
    %v133 = vpop.f32.mrb[0].mxu0
    %v134 = vpop.f32.mrb[0].mxu0
    %v135 = vadd.f32 0.0, %v134
    %v136 = vpop.f32.mrb[0].mxu0
    %137 = vmatprep.mubr.bf16.mxu0 0
    %138 = vmatmul.mubr.bf16.gmra.mrb[0].mxu0 %v95
    %v139 = vpop.f32.mrb[0].mxu0
    %v140 = vadd.f32 0.0, %v139
    %v141 = vpop.f32.mrb[0].mxu0
    %v142 = vpop.f32.mrb[0].mxu0
    %v143 = vadd.f32 0.0, %v142
    %v144 = vpop.f32.mrb[0].mxu0
    %145 = vdwg.mxu0
    %v150 = vunpack.c.l.b16 %v71
    %v151 = vunpack.c.l.b16 %v72
    %v152 = vunpack.c.l.b16 %v73
    %v153 = vunpack.c.l.b16 %v74
    %v154 = vpack.c.b16 %v151, %v150
    %v155 = vpack.c.b16 %v153, %v152
    %v157 = vsel %vm90, %v154, 0
    %v160 = vsel %vm90, %v155, 0
    %162 = vmatprep.subr.bf16.mxu0 0
    %163 = vmatpush1.bf16.msra.mxu0 %v55
    %164 = vmatprep.subr.bf16.mxu0 0
    %165 = vmatpush1.bf16.msra.mxu0 %v58
    %166 = vmatprep.subr.bf16.mxu0 0
    %167 = vmatpush1.bf16.msra.mxu0 0
    %168 = vmatprep.subr.bf16.mxu0 0
    %169 = vmatpush1.bf16.msra.mxu0 0
    %170 = vmatprep.subr.bf16.mxu0 0
    %171 = vmatpush1.bf16.msra.mxu0 0
    %172 = vmatprep.subr.bf16.mxu0 0
    %173 = vmatpush1.bf16.msra.mxu0 0
    %174 = vmatprep.subr.bf16.mxu0 0
    %175 = vmatpush1.bf16.msra.mxu0 0
    %176 = vmatprep.subr.bf16.mxu0 0
    %177 = vmatpush1.bf16.msra.mxu0 0
    %178 = vmatprep.subr.bf16.mxu0 0
    %179 = vmatpush1.bf16.msra.mxu0 0
    %180 = vmatprep.subr.bf16.mxu0 0
    %181 = vmatpush1.bf16.msra.mxu0 0
    %182 = vmatprep.subr.bf16.mxu0 0
    %183 = vmatpush1.bf16.msra.mxu0 0
    %184 = vmatprep.subr.bf16.mxu0 0
    %185 = vmatpush1.bf16.msra.mxu0 0
    %186 = vmatprep.subr.bf16.mxu0 0
    %187 = vmatpush1.bf16.msra.mxu0 0
    %188 = vmatprep.subr.bf16.mxu0 0
    %189 = vmatpush1.bf16.msra.mxu0 0
    %190 = vmatprep.subr.bf16.mxu0 0
    %191 = vmatpush1.bf16.msra.mxu0 0
    %192 = vmatprep.subr.bf16.mxu0 0
    %193 = vmatpush1.bf16.msra.mxu0 0
    %194 = vmatprep.mubr.bf16.mxu0 0
    %195 = vmatmul.mubr.bf16.gmra.mrb[0].mxu0 %v157
    %v196 = vpop.f32.mrb[0].mxu0
    %v197 = vadd.f32 %v132, %v196
    %v198 = vpop.f32.mrb[0].mxu0
    %v199 = vpop.f32.mrb[0].mxu0
    %v200 = vadd.f32 %v135, %v199
    %v201 = vpop.f32.mrb[0].mxu0
    %202 = vmatprep.mubr.bf16.mxu0 0
    %203 = vmatmul.mubr.bf16.gmra.mrb[0].mxu0 %v160
    %v204 = vpop.f32.mrb[0].mxu0
    %v205 = vadd.f32 %v140, %v204
    %v206 = vpop.f32.mrb[0].mxu0
    %v207 = vpop.f32.mrb[0].mxu0
    %v208 = vadd.f32 %v143, %v207
    %v209 = vpop.f32.mrb[0].mxu0
    %210 = vdwg.mxu0
    %s211 = scalar_lea.vmem %s1, 32
    %v212 = vld [vmem:[%s211] sm:$0xf]
    %v213 = vld [vmem:[%s211 + $0x4] sm:$0xf]
    %v214 = vld [vmem:[%s211 + $0x8] sm:$0xf]
    %v215 = vld [vmem:[%s211 + $0xc] sm:$0xf]
    %v220 = vunpack.c.l.b16 %v212
    %v221 = vunpack.c.l.b16 %v213
    %v222 = vunpack.c.l.b16 %v214
    %v223 = vunpack.c.l.b16 %v215
    %v224 = vpack.c.b16 %v221, %v220
    %v225 = vpack.c.b16 %v223, %v222
    %v227 = vsel %vm90, %v224, 0
    %v230 = vsel %vm90, %v225, 0
    %232 = vmatprep.subr.bf16.mxu0 0
    %233 = vmatpush1.bf16.msra.mxu0 %v66
    %234 = vmatprep.subr.bf16.mxu0 0
    %235 = vmatpush1.bf16.msra.mxu0 %v69
    %236 = vmatprep.subr.bf16.mxu0 0
    %237 = vmatpush1.bf16.msra.mxu0 0
    %238 = vmatprep.subr.bf16.mxu0 0
    %239 = vmatpush1.bf16.msra.mxu0 0
    %240 = vmatprep.subr.bf16.mxu0 0
    %241 = vmatpush1.bf16.msra.mxu0 0
    %242 = vmatprep.subr.bf16.mxu0 0
    %243 = vmatpush1.bf16.msra.mxu0 0
    %244 = vmatprep.subr.bf16.mxu0 0
    %245 = vmatpush1.bf16.msra.mxu0 0
    %246 = vmatprep.subr.bf16.mxu0 0
    %247 = vmatpush1.bf16.msra.mxu0 0
    %248 = vmatprep.subr.bf16.mxu0 0
    %249 = vmatpush1.bf16.msra.mxu0 0
    %250 = vmatprep.subr.bf16.mxu0 0
    %251 = vmatpush1.bf16.msra.mxu0 0
    %252 = vmatprep.subr.bf16.mxu0 0
    %253 = vmatpush1.bf16.msra.mxu0 0
    %254 = vmatprep.subr.bf16.mxu0 0
    %255 = vmatpush1.bf16.msra.mxu0 0
    %256 = vmatprep.subr.bf16.mxu0 0
    %257 = vmatpush1.bf16.msra.mxu0 0
    %258 = vmatprep.subr.bf16.mxu0 0
    %259 = vmatpush1.bf16.msra.mxu0 0
    %260 = vmatprep.subr.bf16.mxu0 0
    %261 = vmatpush1.bf16.msra.mxu0 0
    %262 = vmatprep.subr.bf16.mxu0 0
    %263 = vmatpush1.bf16.msra.mxu0 0
    %264 = vmatprep.mubr.bf16.mxu0 0
    %265 = vmatmul.mubr.bf16.gmra.mrb[0].mxu0 %v227
    %v266 = vpop.f32.mrb[0].mxu0
    %v267 = vadd.f32 0.0, %v266
    %v268 = vpop.f32.mrb[0].mxu0
    %v269 = vpop.f32.mrb[0].mxu0
    %v270 = vadd.f32 0.0, %v269
    %v271 = vpop.f32.mrb[0].mxu0
    %272 = vmatprep.mubr.bf16.mxu0 0
    %273 = vmatmul.mubr.bf16.gmra.mrb[0].mxu0 %v230
    %v274 = vpop.f32.mrb[0].mxu0
    %v275 = vadd.f32 0.0, %v274
    %v276 = vpop.f32.mrb[0].mxu0
    %v277 = vpop.f32.mrb[0].mxu0
    %v278 = vadd.f32 0.0, %v277
    %v279 = vpop.f32.mrb[0].mxu0
    %280 = vdwg.mxu0
    %v281 = vadd.f32 %v197, %v267
    %v282 = vadd.f32 %v200, %v270
    %v283 = vadd.f32 %v205, %v275
    %v284 = vadd.f32 %v208, %v278
    %v285 = vld [vmem:[%s2] sm:$0xff]
    %v286 = vld [vmem:[%s2 + $0x8] sm:$0xff]
    %v287 = vld [vmem:[%s2 + $0x10] sm:$0xff]
    %v288 = vld [vmem:[%s2 + $0x18] sm:$0xff]
    %290 = vset.pattern.permute.xlu0 0
    %291 = vperm.xlu0 %290, %v285
    %v292 = vpop.permute.xlu0 %291
    %295 = vset.pattern.permute.xlu0 0
    %296 = vperm.xlu0 %295, %v286
    %v297 = vpop.permute.xlu0 %296
    %300 = vset.pattern.permute.xlu0 0
    %301 = vperm.xlu0 %300, %v287
    %v302 = vpop.permute.xlu0 %301
    %305 = vset.pattern.permute.xlu0 0
    %306 = vperm.xlu0 %305, %v288
    %v307 = vpop.permute.xlu0 %306
    %v309 = vadd.f32 %v281, %v292
    %v310 = vadd.f32 %v282, %v297
    %v311 = vadd.f32 %v283, %v302
    %v312 = vadd.f32 %v284, %v307
    %v313 = vmax.f32 %v309, 0.0
    %v314 = vmax.f32 %v310, 0.0
    %v315 = vmax.f32 %v311, 0.0
    %v316 = vmax.f32 %v312, 0.0
    %v317 = vpack.c.bf16 %v314, %v313
    %v318 = vpack.c.bf16 %v316, %v315
    %v319 = vld [vmem:[%s3] sm:$0xf]
    %v320 = vld [vmem:[%s3 + $0x4] sm:$0xf]
    %v321 = vld [vmem:[%s3 + $0x8] sm:$0xf]
    %v322 = vld [vmem:[%s3 + $0xc] sm:$0xf]
    %v323 = vld [vmem:[%s4] sm:$0xff]
    %v324 = vld [vmem:[%s4 + $0x8] sm:$0xff]
    %v325 = vld [vmem:[%s4 + $0x10] sm:$0xff]
    %v326 = vld [vmem:[%s4 + $0x18] sm:$0xff]
    %328 = vset.pattern.permute.xlu0 0
    %329 = vperm.xlu0 %328, %v323
    %v330 = vpop.permute.xlu0 %329
    %333 = vset.pattern.permute.xlu0 0
    %334 = vperm.xlu0 %333, %v324
    %v335 = vpop.permute.xlu0 %334
    %338 = vset.pattern.permute.xlu0 0
    %339 = vperm.xlu0 %338, %v325
    %v340 = vpop.permute.xlu0 %339
    %343 = vset.pattern.permute.xlu0 0
    %344 = vperm.xlu0 %343, %v326
    %v345 = vpop.permute.xlu0 %344
    %v351 = vunpack.c.l.b16 %v319
    %v352 = vunpack.c.l.b16 %v320
    %v353 = vunpack.c.l.b16 %v321
    %v354 = vunpack.c.l.b16 %v322
    %v355 = vpack.c.b16 %v352, %v351
    %v356 = vpack.c.b16 %v354, %v353
    %v358 = vsel %vm90, %v355, 0
    %v361 = vsel %vm90, %v356, 0
    %363 = vmatprep.subr.bf16.mxu0 0
    %364 = vmatpush1.bf16.msra.mxu0 %v317
    %365 = vmatprep.subr.bf16.mxu0 0
    %366 = vmatpush1.bf16.msra.mxu0 %v318
    %367 = vmatprep.subr.bf16.mxu0 0
    %368 = vmatpush1.bf16.msra.mxu0 0
    %369 = vmatprep.subr.bf16.mxu0 0
    %370 = vmatpush1.bf16.msra.mxu0 0
    %371 = vmatprep.subr.bf16.mxu0 0
    %372 = vmatpush1.bf16.msra.mxu0 0
    %373 = vmatprep.subr.bf16.mxu0 0
    %374 = vmatpush1.bf16.msra.mxu0 0
    %375 = vmatprep.subr.bf16.mxu0 0
    %376 = vmatpush1.bf16.msra.mxu0 0
    %377 = vmatprep.subr.bf16.mxu0 0
    %378 = vmatpush1.bf16.msra.mxu0 0
    %379 = vmatprep.subr.bf16.mxu0 0
    %380 = vmatpush1.bf16.msra.mxu0 0
    %381 = vmatprep.subr.bf16.mxu0 0
    %382 = vmatpush1.bf16.msra.mxu0 0
    %383 = vmatprep.subr.bf16.mxu0 0
    %384 = vmatpush1.bf16.msra.mxu0 0
    %385 = vmatprep.subr.bf16.mxu0 0
    %386 = vmatpush1.bf16.msra.mxu0 0
    %387 = vmatprep.subr.bf16.mxu0 0
    %388 = vmatpush1.bf16.msra.mxu0 0
    %389 = vmatprep.subr.bf16.mxu0 0
    %390 = vmatpush1.bf16.msra.mxu0 0
    %391 = vmatprep.subr.bf16.mxu0 0
    %392 = vmatpush1.bf16.msra.mxu0 0
    %393 = vmatprep.subr.bf16.mxu0 0
    %394 = vmatpush1.bf16.msra.mxu0 0
    %395 = vmatprep.mubr.bf16.mxu0 0
    %396 = vmatmul.mubr.bf16.gmra.mrb[0].mxu0 %v358
    %v397 = vpop.f32.mrb[0].mxu0
    %v398 = vadd.f32 %v330, %v397
    %v399 = vpop.f32.mrb[0].mxu0
    %v400 = vpop.f32.mrb[0].mxu0
    %v401 = vadd.f32 %v335, %v400
    %v402 = vpop.f32.mrb[0].mxu0
    %403 = vmatprep.mubr.bf16.mxu0 0
    %404 = vmatmul.mubr.bf16.gmra.mrb[0].mxu0 %v361
    %v405 = vpop.f32.mrb[0].mxu0
    %v406 = vadd.f32 %v340, %v405
    %v407 = vpop.f32.mrb[0].mxu0
    %v408 = vpop.f32.mrb[0].mxu0
    %v409 = vadd.f32 %v345, %v408
    %v410 = vpop.f32.mrb[0].mxu0
    %411 = vdwg.mxu0
    %v412 = vadd.f32 %v36, %v398
    %v413 = vadd.f32 %v37, %v401
    %v414 = vadd.f32 %v38, %v406
    %v415 = vadd.f32 %v39, %v409
    %v416 = vmax.f32 %v412, 0.0
    %v417 = vmax.f32 %v413, 0.0
    %v418 = vmax.f32 %v414, 0.0
    %v419 = vmax.f32 %v415, 0.0
    %v420 = vpack.c.bf16 %v417, %v416
    %v421 = vpack.c.bf16 %v419, %v418
    %424 = vrot.lane.b32.xlu0 %v420, 2
    %v425 = vpop.permute.xlu0 %424
    %426 = vrot.lane.b32.xlu0 %v421, 2
    %v427 = vpop.permute.xlu0 %426
    %vm428 = vcmask 15360
    %v430 = vsel %vm428, 0, %v425
    %v433 = vsel %vm428, 0, %v427
    %435 = vrot.lane.b32.xlu0 %v420, 126
    %v436 = vpop.permute.xlu0 %435
    %437 = vrot.lane.b32.xlu0 %v421, 126
    %v438 = vpop.permute.xlu0 %437
    %vm439 = vcmask 506880
    %v441 = vsel %vm439, %v436, 0
    %v444 = vsel %vm439, %v438, 0
    %s446 = scalar_lea.vmem %s1, 48
    %v447 = vld [vmem:[%s446] sm:$0xf]
    %v448 = vld [vmem:[%s446 + $0x4] sm:$0xf]
    %v449 = vld [vmem:[%s446 + $0x8] sm:$0xf]
    %v450 = vld [vmem:[%s446 + $0xc] sm:$0xf]
    %s451 = scalar_lea.vmem %s1, 64
    %v452 = vld [vmem:[%s451] sm:$0xf]
    %v453 = vld [vmem:[%s451 + $0x4] sm:$0xf]
    %v454 = vld [vmem:[%s451 + $0x8] sm:$0xf]
    %v455 = vld [vmem:[%s451 + $0xc] sm:$0xf]
    %v460 = vunpack.c.l.b16 %v452
    %v461 = vunpack.c.l.b16 %v453
    %v462 = vunpack.c.l.b16 %v454
    %v463 = vunpack.c.l.b16 %v455
    %v464 = vpack.c.b16 %v461, %v460
    %v465 = vpack.c.b16 %v463, %v462
    %v467 = vsel %vm90, %v464, 0
    %v470 = vsel %vm90, %v465, 0
    %472 = vmatprep.subr.bf16.mxu0 0
    %473 = vmatpush1.bf16.msra.mxu0 %v420
    %474 = vmatprep.subr.bf16.mxu0 0
    %475 = vmatpush1.bf16.msra.mxu0 %v421
    %476 = vmatprep.subr.bf16.mxu0 0
    %477 = vmatpush1.bf16.msra.mxu0 0
    %478 = vmatprep.subr.bf16.mxu0 0
    %479 = vmatpush1.bf16.msra.mxu0 0
    %480 = vmatprep.subr.bf16.mxu0 0
    %481 = vmatpush1.bf16.msra.mxu0 0
    %482 = vmatprep.subr.bf16.mxu0 0
    %483 = vmatpush1.bf16.msra.mxu0 0
    %484 = vmatprep.subr.bf16.mxu0 0
    %485 = vmatpush1.bf16.msra.mxu0 0
    %486 = vmatprep.subr.bf16.mxu0 0
    %487 = vmatpush1.bf16.msra.mxu0 0
    %488 = vmatprep.subr.bf16.mxu0 0
    %489 = vmatpush1.bf16.msra.mxu0 0
    %490 = vmatprep.subr.bf16.mxu0 0
    %491 = vmatpush1.bf16.msra.mxu0 0
    %492 = vmatprep.subr.bf16.mxu0 0
    %493 = vmatpush1.bf16.msra.mxu0 0
    %494 = vmatprep.subr.bf16.mxu0 0
    %495 = vmatpush1.bf16.msra.mxu0 0
    %496 = vmatprep.subr.bf16.mxu0 0
    %497 = vmatpush1.bf16.msra.mxu0 0
    %498 = vmatprep.subr.bf16.mxu0 0
    %499 = vmatpush1.bf16.msra.mxu0 0
    %500 = vmatprep.subr.bf16.mxu0 0
    %501 = vmatpush1.bf16.msra.mxu0 0
    %502 = vmatprep.subr.bf16.mxu0 0
    %503 = vmatpush1.bf16.msra.mxu0 0
    %504 = vmatprep.mubr.bf16.mxu0 0
    %505 = vmatmul.mubr.bf16.gmra.mrb[0].mxu0 %v467
    %v506 = vpop.f32.mrb[0].mxu0
    %v507 = vadd.f32 0.0, %v506
    %v508 = vpop.f32.mrb[0].mxu0
    %v509 = vpop.f32.mrb[0].mxu0
    %v510 = vadd.f32 0.0, %v509
    %v511 = vpop.f32.mrb[0].mxu0
    %512 = vmatprep.mubr.bf16.mxu0 0
    %513 = vmatmul.mubr.bf16.gmra.mrb[0].mxu0 %v470
    %v514 = vpop.f32.mrb[0].mxu0
    %v515 = vadd.f32 0.0, %v514
    %v516 = vpop.f32.mrb[0].mxu0
    %v517 = vpop.f32.mrb[0].mxu0
    %v518 = vadd.f32 0.0, %v517
    %v519 = vpop.f32.mrb[0].mxu0
    %520 = vdwg.mxu0
    %v525 = vunpack.c.l.b16 %v447
    %v526 = vunpack.c.l.b16 %v448
    %v527 = vunpack.c.l.b16 %v449
    %v528 = vunpack.c.l.b16 %v450
    %v529 = vpack.c.b16 %v526, %v525
    %v530 = vpack.c.b16 %v528, %v527
    %v532 = vsel %vm90, %v529, 0
    %v535 = vsel %vm90, %v530, 0
    %537 = vmatprep.subr.bf16.mxu0 0
    %538 = vmatpush1.bf16.msra.mxu0 %v430
    %539 = vmatprep.subr.bf16.mxu0 0
    %540 = vmatpush1.bf16.msra.mxu0 %v433
    %541 = vmatprep.subr.bf16.mxu0 0
    %542 = vmatpush1.bf16.msra.mxu0 0
    %543 = vmatprep.subr.bf16.mxu0 0
    %544 = vmatpush1.bf16.msra.mxu0 0
    %545 = vmatprep.subr.bf16.mxu0 0
    %546 = vmatpush1.bf16.msra.mxu0 0
    %547 = vmatprep.subr.bf16.mxu0 0
    %548 = vmatpush1.bf16.msra.mxu0 0
    %549 = vmatprep.subr.bf16.mxu0 0
    %550 = vmatpush1.bf16.msra.mxu0 0
    %551 = vmatprep.subr.bf16.mxu0 0
    %552 = vmatpush1.bf16.msra.mxu0 0
    %553 = vmatprep.subr.bf16.mxu0 0
    %554 = vmatpush1.bf16.msra.mxu0 0
    %555 = vmatprep.subr.bf16.mxu0 0
    %556 = vmatpush1.bf16.msra.mxu0 0
    %557 = vmatprep.subr.bf16.mxu0 0
    %558 = vmatpush1.bf16.msra.mxu0 0
    %559 = vmatprep.subr.bf16.mxu0 0
    %560 = vmatpush1.bf16.msra.mxu0 0
    %561 = vmatprep.subr.bf16.mxu0 0
    %562 = vmatpush1.bf16.msra.mxu0 0
    %563 = vmatprep.subr.bf16.mxu0 0
    %564 = vmatpush1.bf16.msra.mxu0 0
    %565 = vmatprep.subr.bf16.mxu0 0
    %566 = vmatpush1.bf16.msra.mxu0 0
    %567 = vmatprep.subr.bf16.mxu0 0
    %568 = vmatpush1.bf16.msra.mxu0 0
    %569 = vmatprep.mubr.bf16.mxu0 0
    %570 = vmatmul.mubr.bf16.gmra.mrb[0].mxu0 %v532
    %v571 = vpop.f32.mrb[0].mxu0
    %v572 = vadd.f32 %v507, %v571
    %v573 = vpop.f32.mrb[0].mxu0
    %v574 = vpop.f32.mrb[0].mxu0
    %v575 = vadd.f32 %v510, %v574
    %v576 = vpop.f32.mrb[0].mxu0
    %577 = vmatprep.mubr.bf16.mxu0 0
    %578 = vmatmul.mubr.bf16.gmra.mrb[0].mxu0 %v535
    %v579 = vpop.f32.mrb[0].mxu0
    %v580 = vadd.f32 %v515, %v579
    %v581 = vpop.f32.mrb[0].mxu0
    %v582 = vpop.f32.mrb[0].mxu0
    %v583 = vadd.f32 %v518, %v582
    %v584 = vpop.f32.mrb[0].mxu0
    %585 = vdwg.mxu0
    %s586 = scalar_lea.vmem %s1, 80
    %v587 = vld [vmem:[%s586] sm:$0xf]
    %v588 = vld [vmem:[%s586 + $0x4] sm:$0xf]
    %v589 = vld [vmem:[%s586 + $0x8] sm:$0xf]
    %v590 = vld [vmem:[%s586 + $0xc] sm:$0xf]
    %v595 = vunpack.c.l.b16 %v587
    %v596 = vunpack.c.l.b16 %v588
    %v597 = vunpack.c.l.b16 %v589
    %v598 = vunpack.c.l.b16 %v590
    %v599 = vpack.c.b16 %v596, %v595
    %v600 = vpack.c.b16 %v598, %v597
    %v602 = vsel %vm90, %v599, 0
    %v605 = vsel %vm90, %v600, 0
    %607 = vmatprep.subr.bf16.mxu0 0
    %608 = vmatpush1.bf16.msra.mxu0 %v441
    %609 = vmatprep.subr.bf16.mxu0 0
    %610 = vmatpush1.bf16.msra.mxu0 %v444
    %611 = vmatprep.subr.bf16.mxu0 0
    %612 = vmatpush1.bf16.msra.mxu0 0
    %613 = vmatprep.subr.bf16.mxu0 0
    %614 = vmatpush1.bf16.msra.mxu0 0
    %615 = vmatprep.subr.bf16.mxu0 0
    %616 = vmatpush1.bf16.msra.mxu0 0
    %617 = vmatprep.subr.bf16.mxu0 0
    %618 = vmatpush1.bf16.msra.mxu0 0
    %619 = vmatprep.subr.bf16.mxu0 0
    %620 = vmatpush1.bf16.msra.mxu0 0
    %621 = vmatprep.subr.bf16.mxu0 0
    %622 = vmatpush1.bf16.msra.mxu0 0
    %623 = vmatprep.subr.bf16.mxu0 0
    %624 = vmatpush1.bf16.msra.mxu0 0
    %625 = vmatprep.subr.bf16.mxu0 0
    %626 = vmatpush1.bf16.msra.mxu0 0
    %627 = vmatprep.subr.bf16.mxu0 0
    %628 = vmatpush1.bf16.msra.mxu0 0
    %629 = vmatprep.subr.bf16.mxu0 0
    %630 = vmatpush1.bf16.msra.mxu0 0
    %631 = vmatprep.subr.bf16.mxu0 0
    %632 = vmatpush1.bf16.msra.mxu0 0
    %633 = vmatprep.subr.bf16.mxu0 0
    %634 = vmatpush1.bf16.msra.mxu0 0
    %635 = vmatprep.subr.bf16.mxu0 0
    %636 = vmatpush1.bf16.msra.mxu0 0
    %637 = vmatprep.subr.bf16.mxu0 0
    %638 = vmatpush1.bf16.msra.mxu0 0
    %639 = vmatprep.mubr.bf16.mxu0 0
    %640 = vmatmul.mubr.bf16.gmra.mrb[0].mxu0 %v602
    %v641 = vpop.f32.mrb[0].mxu0
    %v642 = vadd.f32 0.0, %v641
    %v643 = vpop.f32.mrb[0].mxu0
    %v644 = vpop.f32.mrb[0].mxu0
    %v645 = vadd.f32 0.0, %v644
    %v646 = vpop.f32.mrb[0].mxu0
    %647 = vmatprep.mubr.bf16.mxu0 0
    %648 = vmatmul.mubr.bf16.gmra.mrb[0].mxu0 %v605
    %v649 = vpop.f32.mrb[0].mxu0
    %v650 = vadd.f32 0.0, %v649
    %v651 = vpop.f32.mrb[0].mxu0
    %v652 = vpop.f32.mrb[0].mxu0
    %v653 = vadd.f32 0.0, %v652
    %v654 = vpop.f32.mrb[0].mxu0
    %655 = vdwg.mxu0
    %v656 = vadd.f32 %v572, %v642
    %v657 = vadd.f32 %v575, %v645
    %v658 = vadd.f32 %v580, %v650
    %v659 = vadd.f32 %v583, %v653
    %s660 = scalar_lea.vmem %s2, 32
    %v661 = vld [vmem:[%s660] sm:$0xff]
    %v662 = vld [vmem:[%s660 + $0x8] sm:$0xff]
    %v663 = vld [vmem:[%s660 + $0x10] sm:$0xff]
    %v664 = vld [vmem:[%s660 + $0x18] sm:$0xff]
    %666 = vset.pattern.permute.xlu0 0
    %667 = vperm.xlu0 %666, %v661
    %v668 = vpop.permute.xlu0 %667
    %671 = vset.pattern.permute.xlu0 0
    %672 = vperm.xlu0 %671, %v662
    %v673 = vpop.permute.xlu0 %672
    %676 = vset.pattern.permute.xlu0 0
    %677 = vperm.xlu0 %676, %v663
    %v678 = vpop.permute.xlu0 %677
    %681 = vset.pattern.permute.xlu0 0
    %682 = vperm.xlu0 %681, %v664
    %v683 = vpop.permute.xlu0 %682
    %v685 = vadd.f32 %v656, %v668
    %v686 = vadd.f32 %v657, %v673
    %v687 = vadd.f32 %v658, %v678
    %v688 = vadd.f32 %v659, %v683
    %v689 = vmax.f32 %v685, 0.0
    %v690 = vmax.f32 %v686, 0.0
    %v691 = vmax.f32 %v687, 0.0
    %v692 = vmax.f32 %v688, 0.0
    %v693 = vpack.c.bf16 %v690, %v689
    %v694 = vpack.c.bf16 %v692, %v691
    %s695 = scalar_lea.vmem %s3, 16
    %v696 = vld [vmem:[%s695] sm:$0xf]
    %v697 = vld [vmem:[%s695 + $0x4] sm:$0xf]
    %v698 = vld [vmem:[%s695 + $0x8] sm:$0xf]
    %v699 = vld [vmem:[%s695 + $0xc] sm:$0xf]
    %s700 = scalar_lea.vmem %s4, 32
    %v701 = vld [vmem:[%s700] sm:$0xff]
    %v702 = vld [vmem:[%s700 + $0x8] sm:$0xff]
    %v703 = vld [vmem:[%s700 + $0x10] sm:$0xff]
    %v704 = vld [vmem:[%s700 + $0x18] sm:$0xff]
    %706 = vset.pattern.permute.xlu0 0
    %707 = vperm.xlu0 %706, %v701
    %v708 = vpop.permute.xlu0 %707
    %711 = vset.pattern.permute.xlu0 0
    %712 = vperm.xlu0 %711, %v702
    %v713 = vpop.permute.xlu0 %712
    %716 = vset.pattern.permute.xlu0 0
    %717 = vperm.xlu0 %716, %v703
    %v718 = vpop.permute.xlu0 %717
    %721 = vset.pattern.permute.xlu0 0
    %722 = vperm.xlu0 %721, %v704
    %v723 = vpop.permute.xlu0 %722
    %v729 = vunpack.c.l.b16 %v696
    %v730 = vunpack.c.l.b16 %v697
    %v731 = vunpack.c.l.b16 %v698
    %v732 = vunpack.c.l.b16 %v699
    %v733 = vpack.c.b16 %v730, %v729
    %v734 = vpack.c.b16 %v732, %v731
    %v736 = vsel %vm90, %v733, 0
    %v739 = vsel %vm90, %v734, 0
    %741 = vmatprep.subr.bf16.mxu0 0
    %742 = vmatpush1.bf16.msra.mxu0 %v693
    %743 = vmatprep.subr.bf16.mxu0 0
    %744 = vmatpush1.bf16.msra.mxu0 %v694
    %745 = vmatprep.subr.bf16.mxu0 0
    %746 = vmatpush1.bf16.msra.mxu0 0
    %747 = vmatprep.subr.bf16.mxu0 0
    %748 = vmatpush1.bf16.msra.mxu0 0
    %749 = vmatprep.subr.bf16.mxu0 0
    %750 = vmatpush1.bf16.msra.mxu0 0
    %751 = vmatprep.subr.bf16.mxu0 0
    %752 = vmatpush1.bf16.msra.mxu0 0
    %753 = vmatprep.subr.bf16.mxu0 0
    %754 = vmatpush1.bf16.msra.mxu0 0
    %755 = vmatprep.subr.bf16.mxu0 0
    %756 = vmatpush1.bf16.msra.mxu0 0
    %757 = vmatprep.subr.bf16.mxu0 0
    %758 = vmatpush1.bf16.msra.mxu0 0
    %759 = vmatprep.subr.bf16.mxu0 0
    %760 = vmatpush1.bf16.msra.mxu0 0
    %761 = vmatprep.subr.bf16.mxu0 0
    %762 = vmatpush1.bf16.msra.mxu0 0
    %763 = vmatprep.subr.bf16.mxu0 0
    %764 = vmatpush1.bf16.msra.mxu0 0
    %765 = vmatprep.subr.bf16.mxu0 0
    %766 = vmatpush1.bf16.msra.mxu0 0
    %767 = vmatprep.subr.bf16.mxu0 0
    %768 = vmatpush1.bf16.msra.mxu0 0
    %769 = vmatprep.subr.bf16.mxu0 0
    %770 = vmatpush1.bf16.msra.mxu0 0
    %771 = vmatprep.subr.bf16.mxu0 0
    %772 = vmatpush1.bf16.msra.mxu0 0
    %773 = vmatprep.mubr.bf16.mxu0 0
    %774 = vmatmul.mubr.bf16.gmra.mrb[0].mxu0 %v736
    %v775 = vpop.f32.mrb[0].mxu0
    %v776 = vadd.f32 %v708, %v775
    %v777 = vpop.f32.mrb[0].mxu0
    %v778 = vpop.f32.mrb[0].mxu0
    %v779 = vadd.f32 %v713, %v778
    %v780 = vpop.f32.mrb[0].mxu0
    %781 = vmatprep.mubr.bf16.mxu0 0
    %782 = vmatmul.mubr.bf16.gmra.mrb[0].mxu0 %v739
    %v783 = vpop.f32.mrb[0].mxu0
    %v784 = vadd.f32 %v718, %v783
    %v785 = vpop.f32.mrb[0].mxu0
    %v786 = vpop.f32.mrb[0].mxu0
    %v787 = vadd.f32 %v723, %v786
    %v788 = vpop.f32.mrb[0].mxu0
    %789 = vdwg.mxu0
    %v790 = vadd.f32 %v412, %v776
    %v791 = vadd.f32 %v413, %v779
    %v792 = vadd.f32 %v414, %v784
    %v793 = vadd.f32 %v415, %v787
    %v794 = vmax.f32 %v790, 0.0
    %v795 = vmax.f32 %v791, 0.0
    %v796 = vmax.f32 %v792, 0.0
    %v797 = vmax.f32 %v793, 0.0
    %v798 = vpack.c.bf16 %v795, %v794
    %v799 = vpack.c.bf16 %v797, %v796
    %802 = vrot.lane.b32.xlu0 %v798, 1
    %v803 = vpop.permute.xlu0 %802
    %804 = vrot.lane.b32.xlu0 %v799, 1
    %v805 = vpop.permute.xlu0 %804
    %vm806 = vcmask 7168
    %v808 = vsel %vm806, 0, %v803
    %v811 = vsel %vm806, 0, %v805
    %813 = vrot.lane.b32.xlu0 %v798, 127
    %v814 = vpop.permute.xlu0 %813
    %815 = vrot.lane.b32.xlu0 %v799, 127
    %v816 = vpop.permute.xlu0 %815
    %vm817 = vcmask 515072
    %v819 = vsel %vm817, %v814, 0
    %v822 = vsel %vm817, %v816, 0
    %s824 = scalar_lea.vmem %s1, 96
    %v825 = vld [vmem:[%s824] sm:$0xf]
    %v826 = vld [vmem:[%s824 + $0x4] sm:$0xf]
    %v827 = vld [vmem:[%s824 + $0x8] sm:$0xf]
    %v828 = vld [vmem:[%s824 + $0xc] sm:$0xf]
    %s829 = scalar_lea.vmem %s1, 112
    %v830 = vld [vmem:[%s829] sm:$0xf]
    %v831 = vld [vmem:[%s829 + $0x4] sm:$0xf]
    %v832 = vld [vmem:[%s829 + $0x8] sm:$0xf]
    %v833 = vld [vmem:[%s829 + $0xc] sm:$0xf]
    %v838 = vunpack.c.l.b16 %v830
    %v839 = vunpack.c.l.b16 %v831
    %v840 = vunpack.c.l.b16 %v832
    %v841 = vunpack.c.l.b16 %v833
    %v842 = vpack.c.b16 %v839, %v838
    %v843 = vpack.c.b16 %v841, %v840
    %v845 = vsel %vm90, %v842, 0
    %v848 = vsel %vm90, %v843, 0
    %850 = vmatprep.subr.bf16.mxu0 0
    %851 = vmatpush1.bf16.msra.mxu0 %v798
    %852 = vmatprep.subr.bf16.mxu0 0
    %853 = vmatpush1.bf16.msra.mxu0 %v799
    %854 = vmatprep.subr.bf16.mxu0 0
    %855 = vmatpush1.bf16.msra.mxu0 0
    %856 = vmatprep.subr.bf16.mxu0 0
    %857 = vmatpush1.bf16.msra.mxu0 0
    %858 = vmatprep.subr.bf16.mxu0 0
    %859 = vmatpush1.bf16.msra.mxu0 0
    %860 = vmatprep.subr.bf16.mxu0 0
    %861 = vmatpush1.bf16.msra.mxu0 0
    %862 = vmatprep.subr.bf16.mxu0 0
    %863 = vmatpush1.bf16.msra.mxu0 0
    %864 = vmatprep.subr.bf16.mxu0 0
    %865 = vmatpush1.bf16.msra.mxu0 0
    %866 = vmatprep.subr.bf16.mxu0 0
    %867 = vmatpush1.bf16.msra.mxu0 0
    %868 = vmatprep.subr.bf16.mxu0 0
    %869 = vmatpush1.bf16.msra.mxu0 0
    %870 = vmatprep.subr.bf16.mxu0 0
    %871 = vmatpush1.bf16.msra.mxu0 0
    %872 = vmatprep.subr.bf16.mxu0 0
    %873 = vmatpush1.bf16.msra.mxu0 0
    %874 = vmatprep.subr.bf16.mxu0 0
    %875 = vmatpush1.bf16.msra.mxu0 0
    %876 = vmatprep.subr.bf16.mxu0 0
    %877 = vmatpush1.bf16.msra.mxu0 0
    %878 = vmatprep.subr.bf16.mxu0 0
    %879 = vmatpush1.bf16.msra.mxu0 0
    %880 = vmatprep.subr.bf16.mxu0 0
    %881 = vmatpush1.bf16.msra.mxu0 0
    %882 = vmatprep.mubr.bf16.mxu0 0
    %883 = vmatmul.mubr.bf16.gmra.mrb[0].mxu0 %v845
    %v884 = vpop.f32.mrb[0].mxu0
    %v885 = vadd.f32 0.0, %v884
    %v886 = vpop.f32.mrb[0].mxu0
    %v887 = vpop.f32.mrb[0].mxu0
    %v888 = vadd.f32 0.0, %v887
    %v889 = vpop.f32.mrb[0].mxu0
    %890 = vmatprep.mubr.bf16.mxu0 0
    %891 = vmatmul.mubr.bf16.gmra.mrb[0].mxu0 %v848
    %v892 = vpop.f32.mrb[0].mxu0
    %v893 = vadd.f32 0.0, %v892
    %v894 = vpop.f32.mrb[0].mxu0
    %v895 = vpop.f32.mrb[0].mxu0
    %v896 = vadd.f32 0.0, %v895
    %v897 = vpop.f32.mrb[0].mxu0
    %898 = vdwg.mxu0
    %v903 = vunpack.c.l.b16 %v825
    %v904 = vunpack.c.l.b16 %v826
    %v905 = vunpack.c.l.b16 %v827
    %v906 = vunpack.c.l.b16 %v828
    %v907 = vpack.c.b16 %v904, %v903
    %v908 = vpack.c.b16 %v906, %v905
    %v910 = vsel %vm90, %v907, 0
    %v913 = vsel %vm90, %v908, 0
    %915 = vmatprep.subr.bf16.mxu0 0
    %916 = vmatpush1.bf16.msra.mxu0 %v808
    %917 = vmatprep.subr.bf16.mxu0 0
    %918 = vmatpush1.bf16.msra.mxu0 %v811
    %919 = vmatprep.subr.bf16.mxu0 0
    %920 = vmatpush1.bf16.msra.mxu0 0
    %921 = vmatprep.subr.bf16.mxu0 0
    %922 = vmatpush1.bf16.msra.mxu0 0
    %923 = vmatprep.subr.bf16.mxu0 0
    %924 = vmatpush1.bf16.msra.mxu0 0
    %925 = vmatprep.subr.bf16.mxu0 0
    %926 = vmatpush1.bf16.msra.mxu0 0
    %927 = vmatprep.subr.bf16.mxu0 0
    %928 = vmatpush1.bf16.msra.mxu0 0
    %929 = vmatprep.subr.bf16.mxu0 0
    %930 = vmatpush1.bf16.msra.mxu0 0
    %931 = vmatprep.subr.bf16.mxu0 0
    %932 = vmatpush1.bf16.msra.mxu0 0
    %933 = vmatprep.subr.bf16.mxu0 0
    %934 = vmatpush1.bf16.msra.mxu0 0
    %935 = vmatprep.subr.bf16.mxu0 0
    %936 = vmatpush1.bf16.msra.mxu0 0
    %937 = vmatprep.subr.bf16.mxu0 0
    %938 = vmatpush1.bf16.msra.mxu0 0
    %939 = vmatprep.subr.bf16.mxu0 0
    %940 = vmatpush1.bf16.msra.mxu0 0
    %941 = vmatprep.subr.bf16.mxu0 0
    %942 = vmatpush1.bf16.msra.mxu0 0
    %943 = vmatprep.subr.bf16.mxu0 0
    %944 = vmatpush1.bf16.msra.mxu0 0
    %945 = vmatprep.subr.bf16.mxu0 0
    %946 = vmatpush1.bf16.msra.mxu0 0
    %947 = vmatprep.mubr.bf16.mxu0 0
    %948 = vmatmul.mubr.bf16.gmra.mrb[0].mxu0 %v910
    %v949 = vpop.f32.mrb[0].mxu0
    %v950 = vadd.f32 %v885, %v949
    %v951 = vpop.f32.mrb[0].mxu0
    %v952 = vpop.f32.mrb[0].mxu0
    %v953 = vadd.f32 %v888, %v952
    %v954 = vpop.f32.mrb[0].mxu0
    %955 = vmatprep.mubr.bf16.mxu0 0
    %956 = vmatmul.mubr.bf16.gmra.mrb[0].mxu0 %v913
    %v957 = vpop.f32.mrb[0].mxu0
    %v958 = vadd.f32 %v893, %v957
    %v959 = vpop.f32.mrb[0].mxu0
    %v960 = vpop.f32.mrb[0].mxu0
    %v961 = vadd.f32 %v896, %v960
    %v962 = vpop.f32.mrb[0].mxu0
    %963 = vdwg.mxu0
    %s964 = scalar_lea.vmem %s1, 128
    %v965 = vld [vmem:[%s964] sm:$0xf]
    %v966 = vld [vmem:[%s964 + $0x4] sm:$0xf]
    %v967 = vld [vmem:[%s964 + $0x8] sm:$0xf]
    %v968 = vld [vmem:[%s964 + $0xc] sm:$0xf]
    %v973 = vunpack.c.l.b16 %v965
    %v974 = vunpack.c.l.b16 %v966
    %v975 = vunpack.c.l.b16 %v967
    %v976 = vunpack.c.l.b16 %v968
    %v977 = vpack.c.b16 %v974, %v973
    %v978 = vpack.c.b16 %v976, %v975
    %v980 = vsel %vm90, %v977, 0
    %v983 = vsel %vm90, %v978, 0
    %985 = vmatprep.subr.bf16.mxu0 0
    %986 = vmatpush1.bf16.msra.mxu0 %v819
    %987 = vmatprep.subr.bf16.mxu0 0
    %988 = vmatpush1.bf16.msra.mxu0 %v822
    %989 = vmatprep.subr.bf16.mxu0 0
    %990 = vmatpush1.bf16.msra.mxu0 0
    %991 = vmatprep.subr.bf16.mxu0 0
    %992 = vmatpush1.bf16.msra.mxu0 0
    %993 = vmatprep.subr.bf16.mxu0 0
    %994 = vmatpush1.bf16.msra.mxu0 0
    %995 = vmatprep.subr.bf16.mxu0 0
    %996 = vmatpush1.bf16.msra.mxu0 0
    %997 = vmatprep.subr.bf16.mxu0 0
    %998 = vmatpush1.bf16.msra.mxu0 0
    %999 = vmatprep.subr.bf16.mxu0 0
    %1000 = vmatpush1.bf16.msra.mxu0 0
    %1001 = vmatprep.subr.bf16.mxu0 0
    %1002 = vmatpush1.bf16.msra.mxu0 0
    %1003 = vmatprep.subr.bf16.mxu0 0
    %1004 = vmatpush1.bf16.msra.mxu0 0
    %1005 = vmatprep.subr.bf16.mxu0 0
    %1006 = vmatpush1.bf16.msra.mxu0 0
    %1007 = vmatprep.subr.bf16.mxu0 0
    %1008 = vmatpush1.bf16.msra.mxu0 0
    %1009 = vmatprep.subr.bf16.mxu0 0
    %1010 = vmatpush1.bf16.msra.mxu0 0
    %1011 = vmatprep.subr.bf16.mxu0 0
    %1012 = vmatpush1.bf16.msra.mxu0 0
    %1013 = vmatprep.subr.bf16.mxu0 0
    %1014 = vmatpush1.bf16.msra.mxu0 0
    %1015 = vmatprep.subr.bf16.mxu0 0
    %1016 = vmatpush1.bf16.msra.mxu0 0
    %1017 = vmatprep.mubr.bf16.mxu0 0
    %1018 = vmatmul.mubr.bf16.gmra.mrb[0].mxu0 %v980
    %v1019 = vpop.f32.mrb[0].mxu0
    %v1020 = vadd.f32 0.0, %v1019
    %v1021 = vpop.f32.mrb[0].mxu0
    %v1022 = vpop.f32.mrb[0].mxu0
    %v1023 = vadd.f32 0.0, %v1022
    %v1024 = vpop.f32.mrb[0].mxu0
    %1025 = vmatprep.mubr.bf16.mxu0 0
    %1026 = vmatmul.mubr.bf16.gmra.mrb[0].mxu0 %v983
    %v1027 = vpop.f32.mrb[0].mxu0
    %v1028 = vadd.f32 0.0, %v1027
    %v1029 = vpop.f32.mrb[0].mxu0
    %v1030 = vpop.f32.mrb[0].mxu0
    %v1031 = vadd.f32 0.0, %v1030
    %v1032 = vpop.f32.mrb[0].mxu0
    %1033 = vdwg.mxu0
    %v1034 = vadd.f32 %v950, %v1020
    %v1035 = vadd.f32 %v953, %v1023
    %v1036 = vadd.f32 %v958, %v1028
    %v1037 = vadd.f32 %v961, %v1031
    %s1038 = scalar_lea.vmem %s2, 64
    %v1039 = vld [vmem:[%s1038] sm:$0xff]
    %v1040 = vld [vmem:[%s1038 + $0x8] sm:$0xff]
    %v1041 = vld [vmem:[%s1038 + $0x10] sm:$0xff]
    %v1042 = vld [vmem:[%s1038 + $0x18] sm:$0xff]
    %1044 = vset.pattern.permute.xlu0 0
    %1045 = vperm.xlu0 %1044, %v1039
    %v1046 = vpop.permute.xlu0 %1045
    %1049 = vset.pattern.permute.xlu0 0
    %1050 = vperm.xlu0 %1049, %v1040
    %v1051 = vpop.permute.xlu0 %1050
    %1054 = vset.pattern.permute.xlu0 0
    %1055 = vperm.xlu0 %1054, %v1041
    %v1056 = vpop.permute.xlu0 %1055
    %1059 = vset.pattern.permute.xlu0 0
    %1060 = vperm.xlu0 %1059, %v1042
    %v1061 = vpop.permute.xlu0 %1060
    %v1063 = vadd.f32 %v1034, %v1046
    %v1064 = vadd.f32 %v1035, %v1051
    %v1065 = vadd.f32 %v1036, %v1056
    %v1066 = vadd.f32 %v1037, %v1061
    %v1067 = vmax.f32 %v1063, 0.0
    %v1068 = vmax.f32 %v1064, 0.0
    %v1069 = vmax.f32 %v1065, 0.0
    %v1070 = vmax.f32 %v1066, 0.0
    %v1071 = vpack.c.bf16 %v1068, %v1067
    %v1072 = vpack.c.bf16 %v1070, %v1069
    %s1073 = scalar_lea.vmem %s3, 32
    %v1074 = vld [vmem:[%s1073] sm:$0xf]
    %v1075 = vld [vmem:[%s1073 + $0x4] sm:$0xf]
    %v1076 = vld [vmem:[%s1073 + $0x8] sm:$0xf]
    %v1077 = vld [vmem:[%s1073 + $0xc] sm:$0xf]
    %s1078 = scalar_lea.vmem %s4, 64
    %v1079 = vld [vmem:[%s1078] sm:$0xff]
    %v1080 = vld [vmem:[%s1078 + $0x8] sm:$0xff]
    %v1081 = vld [vmem:[%s1078 + $0x10] sm:$0xff]
    %v1082 = vld [vmem:[%s1078 + $0x18] sm:$0xff]
    %1084 = vset.pattern.permute.xlu0 0
    %1085 = vperm.xlu0 %1084, %v1079
    %v1086 = vpop.permute.xlu0 %1085
    %1089 = vset.pattern.permute.xlu0 0
    %1090 = vperm.xlu0 %1089, %v1080
    %v1091 = vpop.permute.xlu0 %1090
    %1094 = vset.pattern.permute.xlu0 0
    %1095 = vperm.xlu0 %1094, %v1081
    %v1096 = vpop.permute.xlu0 %1095
    %1099 = vset.pattern.permute.xlu0 0
    %1100 = vperm.xlu0 %1099, %v1082
    %v1101 = vpop.permute.xlu0 %1100
    %v1107 = vunpack.c.l.b16 %v1074
    %v1108 = vunpack.c.l.b16 %v1075
    %v1109 = vunpack.c.l.b16 %v1076
    %v1110 = vunpack.c.l.b16 %v1077
    %v1111 = vpack.c.b16 %v1108, %v1107
    %v1112 = vpack.c.b16 %v1110, %v1109
    %v1114 = vsel %vm90, %v1111, 0
    %v1117 = vsel %vm90, %v1112, 0
    %1119 = vmatprep.subr.bf16.mxu0 0
    %1120 = vmatpush1.bf16.msra.mxu0 %v1071
    %1121 = vmatprep.subr.bf16.mxu0 0
    %1122 = vmatpush1.bf16.msra.mxu0 %v1072
    %1123 = vmatprep.subr.bf16.mxu0 0
    %1124 = vmatpush1.bf16.msra.mxu0 0
    %1125 = vmatprep.subr.bf16.mxu0 0
    %1126 = vmatpush1.bf16.msra.mxu0 0
    %1127 = vmatprep.subr.bf16.mxu0 0
    %1128 = vmatpush1.bf16.msra.mxu0 0
    %1129 = vmatprep.subr.bf16.mxu0 0
    %1130 = vmatpush1.bf16.msra.mxu0 0
    %1131 = vmatprep.subr.bf16.mxu0 0
    %1132 = vmatpush1.bf16.msra.mxu0 0
    %1133 = vmatprep.subr.bf16.mxu0 0
    %1134 = vmatpush1.bf16.msra.mxu0 0
    %1135 = vmatprep.subr.bf16.mxu0 0
    %1136 = vmatpush1.bf16.msra.mxu0 0
    %1137 = vmatprep.subr.bf16.mxu0 0
    %1138 = vmatpush1.bf16.msra.mxu0 0
    %1139 = vmatprep.subr.bf16.mxu0 0
    %1140 = vmatpush1.bf16.msra.mxu0 0
    %1141 = vmatprep.subr.bf16.mxu0 0
    %1142 = vmatpush1.bf16.msra.mxu0 0
    %1143 = vmatprep.subr.bf16.mxu0 0
    %1144 = vmatpush1.bf16.msra.mxu0 0
    %1145 = vmatprep.subr.bf16.mxu0 0
    %1146 = vmatpush1.bf16.msra.mxu0 0
    %1147 = vmatprep.subr.bf16.mxu0 0
    %1148 = vmatpush1.bf16.msra.mxu0 0
    %1149 = vmatprep.subr.bf16.mxu0 0
    %1150 = vmatpush1.bf16.msra.mxu0 0
    %1151 = vmatprep.mubr.bf16.mxu0 0
    %1152 = vmatmul.mubr.bf16.gmra.mrb[0].mxu0 %v1114
    %v1153 = vpop.f32.mrb[0].mxu0
    %v1154 = vadd.f32 %v1086, %v1153
    %v1155 = vpop.f32.mrb[0].mxu0
    %v1156 = vpop.f32.mrb[0].mxu0
    %v1157 = vadd.f32 %v1091, %v1156
    %v1158 = vpop.f32.mrb[0].mxu0
    %1159 = vmatprep.mubr.bf16.mxu0 0
    %1160 = vmatmul.mubr.bf16.gmra.mrb[0].mxu0 %v1117
    %v1161 = vpop.f32.mrb[0].mxu0
    %v1162 = vadd.f32 %v1096, %v1161
    %v1163 = vpop.f32.mrb[0].mxu0
    %v1164 = vpop.f32.mrb[0].mxu0
    %v1165 = vadd.f32 %v1101, %v1164
    %v1166 = vpop.f32.mrb[0].mxu0
    %1167 = vdwg.mxu0
    %v1168 = vadd.f32 %v790, %v1154
    %v1169 = vadd.f32 %v791, %v1157
    %v1170 = vadd.f32 %v792, %v1162
    %v1171 = vadd.f32 %v793, %v1165
    %vm1172 = vcmask 523264
    %1173 = vst.msk [vmem:[#allocation5] sm:$0xff] %vm1172, %v1168
    %1174 = vst.msk [vmem:[#allocation5 + $0x8] sm:$0xff] %vm1172, %v1169
    %1175 = vst.msk [vmem:[#allocation5 + $0x10] sm:$0xff] %vm1172, %v1170
    %1176 = vst.msk [vmem:[#allocation5 + $0x18] sm:$0xff] %vm1172, %v1171
    %s1177 = scalar_lea.vmem [#allocation2], 32
    %v1178 = vld [vmem:[%s1177] sm:$0xff]
    %v1179 = vld [vmem:[%s1177 + $0x8] sm:$0xff]
    %v1180 = vld [vmem:[%s1177 + $0x10] sm:$0xff]
    %v1181 = vld [vmem:[%s1177 + $0x18] sm:$0xff]
    %v1182 = vmax.f32 %v1178, 0.0
    %v1183 = vmax.f32 %v1179, 0.0
    %v1184 = vmax.f32 %v1180, 0.0
    %v1185 = vmax.f32 %v1181, 0.0
    %v1186 = vpack.c.bf16 %v1183, %v1182
    %v1187 = vpack.c.bf16 %v1185, %v1184
    %1190 = vrot.lane.b32.xlu0 %v1186, 4
    %v1191 = vpop.permute.xlu0 %1190
    %1192 = vrot.lane.b32.xlu0 %v1187, 4
    %v1193 = vpop.permute.xlu0 %1192
    %v1195 = vsel %vm52, 0, %v1191
    %v1198 = vsel %vm52, 0, %v1193
    %1200 = vrot.lane.b32.xlu0 %v1186, 124
    %v1201 = vpop.permute.xlu0 %1200
    %1202 = vrot.lane.b32.xlu0 %v1187, 124
    %v1203 = vpop.permute.xlu0 %1202
    %v1205 = vsel %vm64, %v1201, 0
    %v1208 = vsel %vm64, %v1203, 0
    %v1210 = vld [vmem:[%s1] sm:$0xf]
    %v1211 = vld [vmem:[%s1 + $0x4] sm:$0xf]
    %v1212 = vld [vmem:[%s1 + $0x8] sm:$0xf]
    %v1213 = vld [vmem:[%s1 + $0xc] sm:$0xf]
    %v1214 = vld [vmem:[%s75] sm:$0xf]
    %v1215 = vld [vmem:[%s75 + $0x4] sm:$0xf]
    %v1216 = vld [vmem:[%s75 + $0x8] sm:$0xf]
    %v1217 = vld [vmem:[%s75 + $0xc] sm:$0xf]
    %v1222 = vunpack.c.l.b16 %v1214
    %v1223 = vunpack.c.l.b16 %v1215
    %v1224 = vunpack.c.l.b16 %v1216
    %v1225 = vunpack.c.l.b16 %v1217
    %v1226 = vpack.c.b16 %v1223, %v1222
    %v1227 = vpack.c.b16 %v1225, %v1224
    %v1229 = vsel %vm90, %v1226, 0
    %v1232 = vsel %vm90, %v1227, 0
    %1234 = vmatprep.subr.bf16.mxu0 0
    %1235 = vmatpush1.bf16.msra.mxu0 %v1186
    %1236 = vmatprep.subr.bf16.mxu0 0
    %1237 = vmatpush1.bf16.msra.mxu0 %v1187
    %1238 = vmatprep.subr.bf16.mxu0 0
    %1239 = vmatpush1.bf16.msra.mxu0 0
    %1240 = vmatprep.subr.bf16.mxu0 0
    %1241 = vmatpush1.bf16.msra.mxu0 0
    %1242 = vmatprep.subr.bf16.mxu0 0
    %1243 = vmatpush1.bf16.msra.mxu0 0
    %1244 = vmatprep.subr.bf16.mxu0 0
    %1245 = vmatpush1.bf16.msra.mxu0 0
    %1246 = vmatprep.subr.bf16.mxu0 0
    %1247 = vmatpush1.bf16.msra.mxu0 0
    %1248 = vmatprep.subr.bf16.mxu0 0
    %1249 = vmatpush1.bf16.msra.mxu0 0
    %1250 = vmatprep.subr.bf16.mxu0 0
    %1251 = vmatpush1.bf16.msra.mxu0 0
    %1252 = vmatprep.subr.bf16.mxu0 0
    %1253 = vmatpush1.bf16.msra.mxu0 0
    %1254 = vmatprep.subr.bf16.mxu0 0
    %1255 = vmatpush1.bf16.msra.mxu0 0
    %1256 = vmatprep.subr.bf16.mxu0 0
    %1257 = vmatpush1.bf16.msra.mxu0 0
    %1258 = vmatprep.subr.bf16.mxu0 0
    %1259 = vmatpush1.bf16.msra.mxu0 0
    %1260 = vmatprep.subr.bf16.mxu0 0
    %1261 = vmatpush1.bf16.msra.mxu0 0
    %1262 = vmatprep.subr.bf16.mxu0 0
    %1263 = vmatpush1.bf16.msra.mxu0 0
    %1264 = vmatprep.subr.bf16.mxu0 0
    %1265 = vmatpush1.bf16.msra.mxu0 0
    %1266 = vmatprep.mubr.bf16.mxu0 0
    %1267 = vmatmul.mubr.bf16.gmra.mrb[0].mxu0 %v1229
    %v1268 = vpop.f32.mrb[0].mxu0
    %v1269 = vadd.f32 0.0, %v1268
    %v1270 = vpop.f32.mrb[0].mxu0
    %v1271 = vpop.f32.mrb[0].mxu0
    %v1272 = vadd.f32 0.0, %v1271
    %v1273 = vpop.f32.mrb[0].mxu0
    %1274 = vmatprep.mubr.bf16.mxu0 0
    %1275 = vmatmul.mubr.bf16.gmra.mrb[0].mxu0 %v1232
    %v1276 = vpop.f32.mrb[0].mxu0
    %v1277 = vadd.f32 0.0, %v1276
    %v1278 = vpop.f32.mrb[0].mxu0
    %v1279 = vpop.f32.mrb[0].mxu0
    %v1280 = vadd.f32 0.0, %v1279
    %v1281 = vpop.f32.mrb[0].mxu0
    %1282 = vdwg.mxu0
    %v1287 = vunpack.c.l.b16 %v1210
    %v1288 = vunpack.c.l.b16 %v1211
    %v1289 = vunpack.c.l.b16 %v1212
    %v1290 = vunpack.c.l.b16 %v1213
    %v1291 = vpack.c.b16 %v1288, %v1287
    %v1292 = vpack.c.b16 %v1290, %v1289
    %v1294 = vsel %vm90, %v1291, 0
    %v1297 = vsel %vm90, %v1292, 0
    %1299 = vmatprep.subr.bf16.mxu0 0
    %1300 = vmatpush1.bf16.msra.mxu0 %v1195
    %1301 = vmatprep.subr.bf16.mxu0 0
    %1302 = vmatpush1.bf16.msra.mxu0 %v1198
    %1303 = vmatprep.subr.bf16.mxu0 0
    %1304 = vmatpush1.bf16.msra.mxu0 0
    %1305 = vmatprep.subr.bf16.mxu0 0
    %1306 = vmatpush1.bf16.msra.mxu0 0
    %1307 = vmatprep.subr.bf16.mxu0 0
    %1308 = vmatpush1.bf16.msra.mxu0 0
    %1309 = vmatprep.subr.bf16.mxu0 0
    %1310 = vmatpush1.bf16.msra.mxu0 0
    %1311 = vmatprep.subr.bf16.mxu0 0
    %1312 = vmatpush1.bf16.msra.mxu0 0
    %1313 = vmatprep.subr.bf16.mxu0 0
    %1314 = vmatpush1.bf16.msra.mxu0 0
    %1315 = vmatprep.subr.bf16.mxu0 0
    %1316 = vmatpush1.bf16.msra.mxu0 0
    %1317 = vmatprep.subr.bf16.mxu0 0
    %1318 = vmatpush1.bf16.msra.mxu0 0
    %1319 = vmatprep.subr.bf16.mxu0 0
    %1320 = vmatpush1.bf16.msra.mxu0 0
    %1321 = vmatprep.subr.bf16.mxu0 0
    %1322 = vmatpush1.bf16.msra.mxu0 0
    %1323 = vmatprep.subr.bf16.mxu0 0
    %1324 = vmatpush1.bf16.msra.mxu0 0
    %1325 = vmatprep.subr.bf16.mxu0 0
    %1326 = vmatpush1.bf16.msra.mxu0 0
    %1327 = vmatprep.subr.bf16.mxu0 0
    %1328 = vmatpush1.bf16.msra.mxu0 0
    %1329 = vmatprep.subr.bf16.mxu0 0
    %1330 = vmatpush1.bf16.msra.mxu0 0
    %1331 = vmatprep.mubr.bf16.mxu0 0
    %1332 = vmatmul.mubr.bf16.gmra.mrb[0].mxu0 %v1294
    %v1333 = vpop.f32.mrb[0].mxu0
    %v1334 = vadd.f32 %v1269, %v1333
    %v1335 = vpop.f32.mrb[0].mxu0
    %v1336 = vpop.f32.mrb[0].mxu0
    %v1337 = vadd.f32 %v1272, %v1336
    %v1338 = vpop.f32.mrb[0].mxu0
    %1339 = vmatprep.mubr.bf16.mxu0 0
    %1340 = vmatmul.mubr.bf16.gmra.mrb[0].mxu0 %v1297
    %v1341 = vpop.f32.mrb[0].mxu0
    %v1342 = vadd.f32 %v1277, %v1341
    %v1343 = vpop.f32.mrb[0].mxu0
    %v1344 = vpop.f32.mrb[0].mxu0
    %v1345 = vadd.f32 %v1280, %v1344
    %v1346 = vpop.f32.mrb[0].mxu0
    %1347 = vdwg.mxu0
    %v1348 = vld [vmem:[%s211] sm:$0xf]
    %v1349 = vld [vmem:[%s211 + $0x4] sm:$0xf]
    %v1350 = vld [vmem:[%s211 + $0x8] sm:$0xf]
    %v1351 = vld [vmem:[%s211 + $0xc] sm:$0xf]
    %v1356 = vunpack.c.l.b16 %v1348
    %v1357 = vunpack.c.l.b16 %v1349
    %v1358 = vunpack.c.l.b16 %v1350
    %v1359 = vunpack.c.l.b16 %v1351
    %v1360 = vpack.c.b16 %v1357, %v1356
    %v1361 = vpack.c.b16 %v1359, %v1358
    %v1363 = vsel %vm90, %v1360, 0
    %v1366 = vsel %vm90, %v1361, 0
    %1368 = vmatprep.subr.bf16.mxu0 0
    %1369 = vmatpush1.bf16.msra.mxu0 %v1205
    %1370 = vmatprep.subr.bf16.mxu0 0
    %1371 = vmatpush1.bf16.msra.mxu0 %v1208
    %1372 = vmatprep.subr.bf16.mxu0 0
    %1373 = vmatpush1.bf16.msra.mxu0 0
    %1374 = vmatprep.subr.bf16.mxu0 0
    %1375 = vmatpush1.bf16.msra.mxu0 0
    %1376 = vmatprep.subr.bf16.mxu0 0
    %1377 = vmatpush1.bf16.msra.mxu0 0
    %1378 = vmatprep.subr.bf16.mxu0 0
    %1379 = vmatpush1.bf16.msra.mxu0 0
    %1380 = vmatprep.subr.bf16.mxu0 0
    %1381 = vmatpush1.bf16.msra.mxu0 0
    %1382 = vmatprep.subr.bf16.mxu0 0
    %1383 = vmatpush1.bf16.msra.mxu0 0
    %1384 = vmatprep.subr.bf16.mxu0 0
    %1385 = vmatpush1.bf16.msra.mxu0 0
    %1386 = vmatprep.subr.bf16.mxu0 0
    %1387 = vmatpush1.bf16.msra.mxu0 0
    %1388 = vmatprep.subr.bf16.mxu0 0
    %1389 = vmatpush1.bf16.msra.mxu0 0
    %1390 = vmatprep.subr.bf16.mxu0 0
    %1391 = vmatpush1.bf16.msra.mxu0 0
    %1392 = vmatprep.subr.bf16.mxu0 0
    %1393 = vmatpush1.bf16.msra.mxu0 0
    %1394 = vmatprep.subr.bf16.mxu0 0
    %1395 = vmatpush1.bf16.msra.mxu0 0
    %1396 = vmatprep.subr.bf16.mxu0 0
    %1397 = vmatpush1.bf16.msra.mxu0 0
    %1398 = vmatprep.subr.bf16.mxu0 0
    %1399 = vmatpush1.bf16.msra.mxu0 0
    %1400 = vmatprep.mubr.bf16.mxu0 0
    %1401 = vmatmul.mubr.bf16.gmra.mrb[0].mxu0 %v1363
    %v1402 = vpop.f32.mrb[0].mxu0
    %v1403 = vadd.f32 0.0, %v1402
    %v1404 = vpop.f32.mrb[0].mxu0
    %v1405 = vpop.f32.mrb[0].mxu0
    %v1406 = vadd.f32 0.0, %v1405
    %v1407 = vpop.f32.mrb[0].mxu0
    %1408 = vmatprep.mubr.bf16.mxu0 0
    %1409 = vmatmul.mubr.bf16.gmra.mrb[0].mxu0 %v1366
    %v1410 = vpop.f32.mrb[0].mxu0
    %v1411 = vadd.f32 0.0, %v1410
    %v1412 = vpop.f32.mrb[0].mxu0
    %v1413 = vpop.f32.mrb[0].mxu0
    %v1414 = vadd.f32 0.0, %v1413
    %v1415 = vpop.f32.mrb[0].mxu0
    %1416 = vdwg.mxu0
    %v1417 = vadd.f32 %v1334, %v1403
    %v1418 = vadd.f32 %v1337, %v1406
    %v1419 = vadd.f32 %v1342, %v1411
    %v1420 = vadd.f32 %v1345, %v1414
    %v1421 = vld [vmem:[%s2] sm:$0xff]
    %v1422 = vld [vmem:[%s2 + $0x8] sm:$0xff]
    %v1423 = vld [vmem:[%s2 + $0x10] sm:$0xff]
    %v1424 = vld [vmem:[%s2 + $0x18] sm:$0xff]
    %1426 = vset.pattern.permute.xlu0 0
    %1427 = vperm.xlu0 %1426, %v1421
    %v1428 = vpop.permute.xlu0 %1427
    %1431 = vset.pattern.permute.xlu0 0
    %1432 = vperm.xlu0 %1431, %v1422
    %v1433 = vpop.permute.xlu0 %1432
    %1436 = vset.pattern.permute.xlu0 0
    %1437 = vperm.xlu0 %1436, %v1423
    %v1438 = vpop.permute.xlu0 %1437
    %1441 = vset.pattern.permute.xlu0 0
    %1442 = vperm.xlu0 %1441, %v1424
    %v1443 = vpop.permute.xlu0 %1442
    %v1445 = vadd.f32 %v1417, %v1428
    %v1446 = vadd.f32 %v1418, %v1433
    %v1447 = vadd.f32 %v1419, %v1438
    %v1448 = vadd.f32 %v1420, %v1443
    %v1449 = vmax.f32 %v1445, 0.0
    %v1450 = vmax.f32 %v1446, 0.0
    %v1451 = vmax.f32 %v1447, 0.0
    %v1452 = vmax.f32 %v1448, 0.0
    %v1453 = vpack.c.bf16 %v1450, %v1449
    %v1454 = vpack.c.bf16 %v1452, %v1451
    %v1455 = vld [vmem:[%s3] sm:$0xf]
    %v1456 = vld [vmem:[%s3 + $0x4] sm:$0xf]
    %v1457 = vld [vmem:[%s3 + $0x8] sm:$0xf]
    %v1458 = vld [vmem:[%s3 + $0xc] sm:$0xf]
    %v1459 = vld [vmem:[%s4] sm:$0xff]
    %v1460 = vld [vmem:[%s4 + $0x8] sm:$0xff]
    %v1461 = vld [vmem:[%s4 + $0x10] sm:$0xff]
    %v1462 = vld [vmem:[%s4 + $0x18] sm:$0xff]
    %1464 = vset.pattern.permute.xlu0 0
    %1465 = vperm.xlu0 %1464, %v1459
    %v1466 = vpop.permute.xlu0 %1465
    %1469 = vset.pattern.permute.xlu0 0
    %1470 = vperm.xlu0 %1469, %v1460
    %v1471 = vpop.permute.xlu0 %1470
    %1474 = vset.pattern.permute.xlu0 0
    %1475 = vperm.xlu0 %1474, %v1461
    %v1476 = vpop.permute.xlu0 %1475
    %1479 = vset.pattern.permute.xlu0 0
    %1480 = vperm.xlu0 %1479, %v1462
    %v1481 = vpop.permute.xlu0 %1480
    %v1487 = vunpack.c.l.b16 %v1455
    %v1488 = vunpack.c.l.b16 %v1456
    %v1489 = vunpack.c.l.b16 %v1457
    %v1490 = vunpack.c.l.b16 %v1458
    %v1491 = vpack.c.b16 %v1488, %v1487
    %v1492 = vpack.c.b16 %v1490, %v1489
    %v1494 = vsel %vm90, %v1491, 0
    %v1497 = vsel %vm90, %v1492, 0
    %1499 = vmatprep.subr.bf16.mxu0 0
    %1500 = vmatpush1.bf16.msra.mxu0 %v1453
    %1501 = vmatprep.subr.bf16.mxu0 0
    %1502 = vmatpush1.bf16.msra.mxu0 %v1454
    %1503 = vmatprep.subr.bf16.mxu0 0
    %1504 = vmatpush1.bf16.msra.mxu0 0
    %1505 = vmatprep.subr.bf16.mxu0 0
    %1506 = vmatpush1.bf16.msra.mxu0 0
    %1507 = vmatprep.subr.bf16.mxu0 0
    %1508 = vmatpush1.bf16.msra.mxu0 0
    %1509 = vmatprep.subr.bf16.mxu0 0
    %1510 = vmatpush1.bf16.msra.mxu0 0
    %1511 = vmatprep.subr.bf16.mxu0 0
    %1512 = vmatpush1.bf16.msra.mxu0 0
    %1513 = vmatprep.subr.bf16.mxu0 0
    %1514 = vmatpush1.bf16.msra.mxu0 0
    %1515 = vmatprep.subr.bf16.mxu0 0
    %1516 = vmatpush1.bf16.msra.mxu0 0
    %1517 = vmatprep.subr.bf16.mxu0 0
    %1518 = vmatpush1.bf16.msra.mxu0 0
    %1519 = vmatprep.subr.bf16.mxu0 0
    %1520 = vmatpush1.bf16.msra.mxu0 0
    %1521 = vmatprep.subr.bf16.mxu0 0
    %1522 = vmatpush1.bf16.msra.mxu0 0
    %1523 = vmatprep.subr.bf16.mxu0 0
    %1524 = vmatpush1.bf16.msra.mxu0 0
    %1525 = vmatprep.subr.bf16.mxu0 0
    %1526 = vmatpush1.bf16.msra.mxu0 0
    %1527 = vmatprep.subr.bf16.mxu0 0
    %1528 = vmatpush1.bf16.msra.mxu0 0
    %1529 = vmatprep.subr.bf16.mxu0 0
    %1530 = vmatpush1.bf16.msra.mxu0 0
    %1531 = vmatprep.mubr.bf16.mxu0 0
    %1532 = vmatmul.mubr.bf16.gmra.mrb[0].mxu0 %v1494
    %v1533 = vpop.f32.mrb[0].mxu0
    %v1534 = vadd.f32 %v1466, %v1533
    %v1535 = vpop.f32.mrb[0].mxu0
    %v1536 = vpop.f32.mrb[0].mxu0
    %v1537 = vadd.f32 %v1471, %v1536
    %v1538 = vpop.f32.mrb[0].mxu0
    %1539 = vmatprep.mubr.bf16.mxu0 0
    %1540 = vmatmul.mubr.bf16.gmra.mrb[0].mxu0 %v1497
    %v1541 = vpop.f32.mrb[0].mxu0
    %v1542 = vadd.f32 %v1476, %v1541
    %v1543 = vpop.f32.mrb[0].mxu0
    %v1544 = vpop.f32.mrb[0].mxu0
    %v1545 = vadd.f32 %v1481, %v1544
    %v1546 = vpop.f32.mrb[0].mxu0
    %1547 = vdwg.mxu0
    %v1548 = vadd.f32 %v1178, %v1534
    %v1549 = vadd.f32 %v1179, %v1537
    %v1550 = vadd.f32 %v1180, %v1542
    %v1551 = vadd.f32 %v1181, %v1545
    %v1552 = vmax.f32 %v1548, 0.0
    %v1553 = vmax.f32 %v1549, 0.0
    %v1554 = vmax.f32 %v1550, 0.0
    %v1555 = vmax.f32 %v1551, 0.0
    %v1556 = vpack.c.bf16 %v1553, %v1552
    %v1557 = vpack.c.bf16 %v1555, %v1554
    %1560 = vrot.lane.b32.xlu0 %v1556, 2
    %v1561 = vpop.permute.xlu0 %1560
    %1562 = vrot.lane.b32.xlu0 %v1557, 2
    %v1563 = vpop.permute.xlu0 %1562
    %v1565 = vsel %vm428, 0, %v1561
    %v1568 = vsel %vm428, 0, %v1563
    %1570 = vrot.lane.b32.xlu0 %v1556, 126
    %v1571 = vpop.permute.xlu0 %1570
    %1572 = vrot.lane.b32.xlu0 %v1557, 126
    %v1573 = vpop.permute.xlu0 %1572
    %v1575 = vsel %vm439, %v1571, 0
    %v1578 = vsel %vm439, %v1573, 0
    %v1580 = vld [vmem:[%s446] sm:$0xf]
    %v1581 = vld [vmem:[%s446 + $0x4] sm:$0xf]
    %v1582 = vld [vmem:[%s446 + $0x8] sm:$0xf]
    %v1583 = vld [vmem:[%s446 + $0xc] sm:$0xf]
    %v1584 = vld [vmem:[%s451] sm:$0xf]
    %v1585 = vld [vmem:[%s451 + $0x4] sm:$0xf]
    %v1586 = vld [vmem:[%s451 + $0x8] sm:$0xf]
    %v1587 = vld [vmem:[%s451 + $0xc] sm:$0xf]
    %v1592 = vunpack.c.l.b16 %v1584
    %v1593 = vunpack.c.l.b16 %v1585
    %v1594 = vunpack.c.l.b16 %v1586
    %v1595 = vunpack.c.l.b16 %v1587
    %v1596 = vpack.c.b16 %v1593, %v1592
    %v1597 = vpack.c.b16 %v1595, %v1594
    %v1599 = vsel %vm90, %v1596, 0
    %v1602 = vsel %vm90, %v1597, 0
    %1604 = vmatprep.subr.bf16.mxu0 0
    %1605 = vmatpush1.bf16.msra.mxu0 %v1556
    %1606 = vmatprep.subr.bf16.mxu0 0
    %1607 = vmatpush1.bf16.msra.mxu0 %v1557
    %1608 = vmatprep.subr.bf16.mxu0 0
    %1609 = vmatpush1.bf16.msra.mxu0 0
    %1610 = vmatprep.subr.bf16.mxu0 0
    %1611 = vmatpush1.bf16.msra.mxu0 0
    %1612 = vmatprep.subr.bf16.mxu0 0
    %1613 = vmatpush1.bf16.msra.mxu0 0
    %1614 = vmatprep.subr.bf16.mxu0 0
    %1615 = vmatpush1.bf16.msra.mxu0 0
    %1616 = vmatprep.subr.bf16.mxu0 0
    %1617 = vmatpush1.bf16.msra.mxu0 0
    %1618 = vmatprep.subr.bf16.mxu0 0
    %1619 = vmatpush1.bf16.msra.mxu0 0
    %1620 = vmatprep.subr.bf16.mxu0 0
    %1621 = vmatpush1.bf16.msra.mxu0 0
    %1622 = vmatprep.subr.bf16.mxu0 0
    %1623 = vmatpush1.bf16.msra.mxu0 0
    %1624 = vmatprep.subr.bf16.mxu0 0
    %1625 = vmatpush1.bf16.msra.mxu0 0
    %1626 = vmatprep.subr.bf16.mxu0 0
    %1627 = vmatpush1.bf16.msra.mxu0 0
    %1628 = vmatprep.subr.bf16.mxu0 0
    %1629 = vmatpush1.bf16.msra.mxu0 0
    %1630 = vmatprep.subr.bf16.mxu0 0
    %1631 = vmatpush1.bf16.msra.mxu0 0
    %1632 = vmatprep.subr.bf16.mxu0 0
    %1633 = vmatpush1.bf16.msra.mxu0 0
    %1634 = vmatprep.subr.bf16.mxu0 0
    %1635 = vmatpush1.bf16.msra.mxu0 0
    %1636 = vmatprep.mubr.bf16.mxu0 0
    %1637 = vmatmul.mubr.bf16.gmra.mrb[0].mxu0 %v1599
    %v1638 = vpop.f32.mrb[0].mxu0
    %v1639 = vadd.f32 0.0, %v1638
    %v1640 = vpop.f32.mrb[0].mxu0
    %v1641 = vpop.f32.mrb[0].mxu0
    %v1642 = vadd.f32 0.0, %v1641
    %v1643 = vpop.f32.mrb[0].mxu0
    %1644 = vmatprep.mubr.bf16.mxu0 0
    %1645 = vmatmul.mubr.bf16.gmra.mrb[0].mxu0 %v1602
    %v1646 = vpop.f32.mrb[0].mxu0
    %v1647 = vadd.f32 0.0, %v1646
    %v1648 = vpop.f32.mrb[0].mxu0
    %v1649 = vpop.f32.mrb[0].mxu0
    %v1650 = vadd.f32 0.0, %v1649
    %v1651 = vpop.f32.mrb[0].mxu0
    %1652 = vdwg.mxu0
    %v1657 = vunpack.c.l.b16 %v1580
    %v1658 = vunpack.c.l.b16 %v1581
    %v1659 = vunpack.c.l.b16 %v1582
    %v1660 = vunpack.c.l.b16 %v1583
    %v1661 = vpack.c.b16 %v1658, %v1657
    %v1662 = vpack.c.b16 %v1660, %v1659
    %v1664 = vsel %vm90, %v1661, 0
    %v1667 = vsel %vm90, %v1662, 0
    %1669 = vmatprep.subr.bf16.mxu0 0
    %1670 = vmatpush1.bf16.msra.mxu0 %v1565
    %1671 = vmatprep.subr.bf16.mxu0 0
    %1672 = vmatpush1.bf16.msra.mxu0 %v1568
    %1673 = vmatprep.subr.bf16.mxu0 0
    %1674 = vmatpush1.bf16.msra.mxu0 0
    %1675 = vmatprep.subr.bf16.mxu0 0
    %1676 = vmatpush1.bf16.msra.mxu0 0
    %1677 = vmatprep.subr.bf16.mxu0 0
    %1678 = vmatpush1.bf16.msra.mxu0 0
    %1679 = vmatprep.subr.bf16.mxu0 0
    %1680 = vmatpush1.bf16.msra.mxu0 0
    %1681 = vmatprep.subr.bf16.mxu0 0
    %1682 = vmatpush1.bf16.msra.mxu0 0
    %1683 = vmatprep.subr.bf16.mxu0 0
    %1684 = vmatpush1.bf16.msra.mxu0 0
    %1685 = vmatprep.subr.bf16.mxu0 0
    %1686 = vmatpush1.bf16.msra.mxu0 0
    %1687 = vmatprep.subr.bf16.mxu0 0
    %1688 = vmatpush1.bf16.msra.mxu0 0
    %1689 = vmatprep.subr.bf16.mxu0 0
    %1690 = vmatpush1.bf16.msra.mxu0 0
    %1691 = vmatprep.subr.bf16.mxu0 0
    %1692 = vmatpush1.bf16.msra.mxu0 0
    %1693 = vmatprep.subr.bf16.mxu0 0
    %1694 = vmatpush1.bf16.msra.mxu0 0
    %1695 = vmatprep.subr.bf16.mxu0 0
    %1696 = vmatpush1.bf16.msra.mxu0 0
    %1697 = vmatprep.subr.bf16.mxu0 0
    %1698 = vmatpush1.bf16.msra.mxu0 0
    %1699 = vmatprep.subr.bf16.mxu0 0
    %1700 = vmatpush1.bf16.msra.mxu0 0
    %1701 = vmatprep.mubr.bf16.mxu0 0
    %1702 = vmatmul.mubr.bf16.gmra.mrb[0].mxu0 %v1664
    %v1703 = vpop.f32.mrb[0].mxu0
    %v1704 = vadd.f32 %v1639, %v1703
    %v1705 = vpop.f32.mrb[0].mxu0
    %v1706 = vpop.f32.mrb[0].mxu0
    %v1707 = vadd.f32 %v1642, %v1706
    %v1708 = vpop.f32.mrb[0].mxu0
    %1709 = vmatprep.mubr.bf16.mxu0 0
    %1710 = vmatmul.mubr.bf16.gmra.mrb[0].mxu0 %v1667
    %v1711 = vpop.f32.mrb[0].mxu0
    %v1712 = vadd.f32 %v1647, %v1711
    %v1713 = vpop.f32.mrb[0].mxu0
    %v1714 = vpop.f32.mrb[0].mxu0
    %v1715 = vadd.f32 %v1650, %v1714
    %v1716 = vpop.f32.mrb[0].mxu0
    %1717 = vdwg.mxu0
    %v1718 = vld [vmem:[%s586] sm:$0xf]
    %v1719 = vld [vmem:[%s586 + $0x4] sm:$0xf]
    %v1720 = vld [vmem:[%s586 + $0x8] sm:$0xf]
    %v1721 = vld [vmem:[%s586 + $0xc] sm:$0xf]
    %v1726 = vunpack.c.l.b16 %v1718
    %v1727 = vunpack.c.l.b16 %v1719
    %v1728 = vunpack.c.l.b16 %v1720
    %v1729 = vunpack.c.l.b16 %v1721
    %v1730 = vpack.c.b16 %v1727, %v1726
    %v1731 = vpack.c.b16 %v1729, %v1728
    %v1733 = vsel %vm90, %v1730, 0
    %v1736 = vsel %vm90, %v1731, 0
    %1738 = vmatprep.subr.bf16.mxu0 0
    %1739 = vmatpush1.bf16.msra.mxu0 %v1575
    %1740 = vmatprep.subr.bf16.mxu0 0
    %1741 = vmatpush1.bf16.msra.mxu0 %v1578
    %1742 = vmatprep.subr.bf16.mxu0 0
    %1743 = vmatpush1.bf16.msra.mxu0 0
    %1744 = vmatprep.subr.bf16.mxu0 0
    %1745 = vmatpush1.bf16.msra.mxu0 0
    %1746 = vmatprep.subr.bf16.mxu0 0
    %1747 = vmatpush1.bf16.msra.mxu0 0
    %1748 = vmatprep.subr.bf16.mxu0 0
    %1749 = vmatpush1.bf16.msra.mxu0 0
    %1750 = vmatprep.subr.bf16.mxu0 0
    %1751 = vmatpush1.bf16.msra.mxu0 0
    %1752 = vmatprep.subr.bf16.mxu0 0
    %1753 = vmatpush1.bf16.msra.mxu0 0
    %1754 = vmatprep.subr.bf16.mxu0 0
    %1755 = vmatpush1.bf16.msra.mxu0 0
    %1756 = vmatprep.subr.bf16.mxu0 0
    %1757 = vmatpush1.bf16.msra.mxu0 0
    %1758 = vmatprep.subr.bf16.mxu0 0
    %1759 = vmatpush1.bf16.msra.mxu0 0
    %1760 = vmatprep.subr.bf16.mxu0 0
    %1761 = vmatpush1.bf16.msra.mxu0 0
    %1762 = vmatprep.subr.bf16.mxu0 0
    %1763 = vmatpush1.bf16.msra.mxu0 0
    %1764 = vmatprep.subr.bf16.mxu0 0
    %1765 = vmatpush1.bf16.msra.mxu0 0
    %1766 = vmatprep.subr.bf16.mxu0 0
    %1767 = vmatpush1.bf16.msra.mxu0 0
    %1768 = vmatprep.subr.bf16.mxu0 0
    %1769 = vmatpush1.bf16.msra.mxu0 0
    %1770 = vmatprep.mubr.bf16.mxu0 0
    %1771 = vmatmul.mubr.bf16.gmra.mrb[0].mxu0 %v1733
    %v1772 = vpop.f32.mrb[0].mxu0
    %v1773 = vadd.f32 0.0, %v1772
    %v1774 = vpop.f32.mrb[0].mxu0
    %v1775 = vpop.f32.mrb[0].mxu0
    %v1776 = vadd.f32 0.0, %v1775
    %v1777 = vpop.f32.mrb[0].mxu0
    %1778 = vmatprep.mubr.bf16.mxu0 0
    %1779 = vmatmul.mubr.bf16.gmra.mrb[0].mxu0 %v1736
    %v1780 = vpop.f32.mrb[0].mxu0
    %v1781 = vadd.f32 0.0, %v1780
    %v1782 = vpop.f32.mrb[0].mxu0
    %v1783 = vpop.f32.mrb[0].mxu0
    %v1784 = vadd.f32 0.0, %v1783
    %v1785 = vpop.f32.mrb[0].mxu0
    %1786 = vdwg.mxu0
    %v1787 = vadd.f32 %v1704, %v1773
    %v1788 = vadd.f32 %v1707, %v1776
    %v1789 = vadd.f32 %v1712, %v1781
    %v1790 = vadd.f32 %v1715, %v1784
    %v1791 = vld [vmem:[%s660] sm:$0xff]
    %v1792 = vld [vmem:[%s660 + $0x8] sm:$0xff]
    %v1793 = vld [vmem:[%s660 + $0x10] sm:$0xff]
    %v1794 = vld [vmem:[%s660 + $0x18] sm:$0xff]
    %1796 = vset.pattern.permute.xlu0 0
    %1797 = vperm.xlu0 %1796, %v1791
    %v1798 = vpop.permute.xlu0 %1797
    %1801 = vset.pattern.permute.xlu0 0
    %1802 = vperm.xlu0 %1801, %v1792
    %v1803 = vpop.permute.xlu0 %1802
    %1806 = vset.pattern.permute.xlu0 0
    %1807 = vperm.xlu0 %1806, %v1793
    %v1808 = vpop.permute.xlu0 %1807
    %1811 = vset.pattern.permute.xlu0 0
    %1812 = vperm.xlu0 %1811, %v1794
    %v1813 = vpop.permute.xlu0 %1812
    %v1815 = vadd.f32 %v1787, %v1798
    %v1816 = vadd.f32 %v1788, %v1803
    %v1817 = vadd.f32 %v1789, %v1808
    %v1818 = vadd.f32 %v1790, %v1813
    %v1819 = vmax.f32 %v1815, 0.0
    %v1820 = vmax.f32 %v1816, 0.0
    %v1821 = vmax.f32 %v1817, 0.0
    %v1822 = vmax.f32 %v1818, 0.0
    %v1823 = vpack.c.bf16 %v1820, %v1819
    %v1824 = vpack.c.bf16 %v1822, %v1821
    %v1825 = vld [vmem:[%s695] sm:$0xf]
    %v1826 = vld [vmem:[%s695 + $0x4] sm:$0xf]
    %v1827 = vld [vmem:[%s695 + $0x8] sm:$0xf]
    %v1828 = vld [vmem:[%s695 + $0xc] sm:$0xf]
    %v1829 = vld [vmem:[%s700] sm:$0xff]
    %v1830 = vld [vmem:[%s700 + $0x8] sm:$0xff]
    %v1831 = vld [vmem:[%s700 + $0x10] sm:$0xff]
    %v1832 = vld [vmem:[%s700 + $0x18] sm:$0xff]
    %1834 = vset.pattern.permute.xlu0 0
    %1835 = vperm.xlu0 %1834, %v1829
    %v1836 = vpop.permute.xlu0 %1835
    %1839 = vset.pattern.permute.xlu0 0
    %1840 = vperm.xlu0 %1839, %v1830
    %v1841 = vpop.permute.xlu0 %1840
    %1844 = vset.pattern.permute.xlu0 0
    %1845 = vperm.xlu0 %1844, %v1831
    %v1846 = vpop.permute.xlu0 %1845
    %1849 = vset.pattern.permute.xlu0 0
    %1850 = vperm.xlu0 %1849, %v1832
    %v1851 = vpop.permute.xlu0 %1850
    %v1857 = vunpack.c.l.b16 %v1825
    %v1858 = vunpack.c.l.b16 %v1826
    %v1859 = vunpack.c.l.b16 %v1827
    %v1860 = vunpack.c.l.b16 %v1828
    %v1861 = vpack.c.b16 %v1858, %v1857
    %v1862 = vpack.c.b16 %v1860, %v1859
    %v1864 = vsel %vm90, %v1861, 0
    %v1867 = vsel %vm90, %v1862, 0
    %1869 = vmatprep.subr.bf16.mxu0 0
    %1870 = vmatpush1.bf16.msra.mxu0 %v1823
    %1871 = vmatprep.subr.bf16.mxu0 0
    %1872 = vmatpush1.bf16.msra.mxu0 %v1824
    %1873 = vmatprep.subr.bf16.mxu0 0
    %1874 = vmatpush1.bf16.msra.mxu0 0
    %1875 = vmatprep.subr.bf16.mxu0 0
    %1876 = vmatpush1.bf16.msra.mxu0 0
    %1877 = vmatprep.subr.bf16.mxu0 0
    %1878 = vmatpush1.bf16.msra.mxu0 0
    %1879 = vmatprep.subr.bf16.mxu0 0
    %1880 = vmatpush1.bf16.msra.mxu0 0
    %1881 = vmatprep.subr.bf16.mxu0 0
    %1882 = vmatpush1.bf16.msra.mxu0 0
    %1883 = vmatprep.subr.bf16.mxu0 0
    %1884 = vmatpush1.bf16.msra.mxu0 0
    %1885 = vmatprep.subr.bf16.mxu0 0
    %1886 = vmatpush1.bf16.msra.mxu0 0
    %1887 = vmatprep.subr.bf16.mxu0 0
    %1888 = vmatpush1.bf16.msra.mxu0 0
    %1889 = vmatprep.subr.bf16.mxu0 0
    %1890 = vmatpush1.bf16.msra.mxu0 0
    %1891 = vmatprep.subr.bf16.mxu0 0
    %1892 = vmatpush1.bf16.msra.mxu0 0
    %1893 = vmatprep.subr.bf16.mxu0 0
    %1894 = vmatpush1.bf16.msra.mxu0 0
    %1895 = vmatprep.subr.bf16.mxu0 0
    %1896 = vmatpush1.bf16.msra.mxu0 0
    %1897 = vmatprep.subr.bf16.mxu0 0
    %1898 = vmatpush1.bf16.msra.mxu0 0
    %1899 = vmatprep.subr.bf16.mxu0 0
    %1900 = vmatpush1.bf16.msra.mxu0 0
    %1901 = vmatprep.mubr.bf16.mxu0 0
    %1902 = vmatmul.mubr.bf16.gmra.mrb[0].mxu0 %v1864
    %v1903 = vpop.f32.mrb[0].mxu0
    %v1904 = vadd.f32 %v1836, %v1903
    %v1905 = vpop.f32.mrb[0].mxu0
    %v1906 = vpop.f32.mrb[0].mxu0
    %v1907 = vadd.f32 %v1841, %v1906
    %v1908 = vpop.f32.mrb[0].mxu0
    %1909 = vmatprep.mubr.bf16.mxu0 0
    %1910 = vmatmul.mubr.bf16.gmra.mrb[0].mxu0 %v1867
    %v1911 = vpop.f32.mrb[0].mxu0
    %v1912 = vadd.f32 %v1846, %v1911
    %v1913 = vpop.f32.mrb[0].mxu0
    %v1914 = vpop.f32.mrb[0].mxu0
    %v1915 = vadd.f32 %v1851, %v1914
    %v1916 = vpop.f32.mrb[0].mxu0
    %1917 = vdwg.mxu0
    %v1918 = vadd.f32 %v1548, %v1904
    %v1919 = vadd.f32 %v1549, %v1907
    %v1920 = vadd.f32 %v1550, %v1912
    %v1921 = vadd.f32 %v1551, %v1915
    %v1922 = vmax.f32 %v1918, 0.0
    %v1923 = vmax.f32 %v1919, 0.0
    %v1924 = vmax.f32 %v1920, 0.0
    %v1925 = vmax.f32 %v1921, 0.0
    %v1926 = vpack.c.bf16 %v1923, %v1922
    %v1927 = vpack.c.bf16 %v1925, %v1924
    %1930 = vrot.lane.b32.xlu0 %v1926, 1
    %v1931 = vpop.permute.xlu0 %1930
    %1932 = vrot.lane.b32.xlu0 %v1927, 1
    %v1933 = vpop.permute.xlu0 %1932
    %v1935 = vsel %vm806, 0, %v1931
    %v1938 = vsel %vm806, 0, %v1933
    %1940 = vrot.lane.b32.xlu0 %v1926, 127
    %v1941 = vpop.permute.xlu0 %1940
    %1942 = vrot.lane.b32.xlu0 %v1927, 127
    %v1943 = vpop.permute.xlu0 %1942
    %v1945 = vsel %vm817, %v1941, 0
    %v1948 = vsel %vm817, %v1943, 0
    %v1950 = vld [vmem:[%s824] sm:$0xf]
    %v1951 = vld [vmem:[%s824 + $0x4] sm:$0xf]
    %v1952 = vld [vmem:[%s824 + $0x8] sm:$0xf]
    %v1953 = vld [vmem:[%s824 + $0xc] sm:$0xf]
    %v1954 = vld [vmem:[%s829] sm:$0xf]
    %v1955 = vld [vmem:[%s829 + $0x4] sm:$0xf]
    %v1956 = vld [vmem:[%s829 + $0x8] sm:$0xf]
    %v1957 = vld [vmem:[%s829 + $0xc] sm:$0xf]
    %v1962 = vunpack.c.l.b16 %v1954
    %v1963 = vunpack.c.l.b16 %v1955
    %v1964 = vunpack.c.l.b16 %v1956
    %v1965 = vunpack.c.l.b16 %v1957
    %v1966 = vpack.c.b16 %v1963, %v1962
    %v1967 = vpack.c.b16 %v1965, %v1964
    %v1969 = vsel %vm90, %v1966, 0
    %v1972 = vsel %vm90, %v1967, 0
    %1974 = vmatprep.subr.bf16.mxu0 0
    %1975 = vmatpush1.bf16.msra.mxu0 %v1926
    %1976 = vmatprep.subr.bf16.mxu0 0
    %1977 = vmatpush1.bf16.msra.mxu0 %v1927
    %1978 = vmatprep.subr.bf16.mxu0 0
    %1979 = vmatpush1.bf16.msra.mxu0 0
    %1980 = vmatprep.subr.bf16.mxu0 0
    %1981 = vmatpush1.bf16.msra.mxu0 0
    %1982 = vmatprep.subr.bf16.mxu0 0
    %1983 = vmatpush1.bf16.msra.mxu0 0
    %1984 = vmatprep.subr.bf16.mxu0 0
    %1985 = vmatpush1.bf16.msra.mxu0 0
    %1986 = vmatprep.subr.bf16.mxu0 0
    %1987 = vmatpush1.bf16.msra.mxu0 0
    %1988 = vmatprep.subr.bf16.mxu0 0
    %1989 = vmatpush1.bf16.msra.mxu0 0
    %1990 = vmatprep.subr.bf16.mxu0 0
    %1991 = vmatpush1.bf16.msra.mxu0 0
    %1992 = vmatprep.subr.bf16.mxu0 0
    %1993 = vmatpush1.bf16.msra.mxu0 0
    %1994 = vmatprep.subr.bf16.mxu0 0
    %1995 = vmatpush1.bf16.msra.mxu0 0
    %1996 = vmatprep.subr.bf16.mxu0 0
    %1997 = vmatpush1.bf16.msra.mxu0 0
    %1998 = vmatprep.subr.bf16.mxu0 0
    %1999 = vmatpush1.bf16.msra.mxu0 0
    %2000 = vmatprep.subr.bf16.mxu0 0
    %2001 = vmatpush1.bf16.msra.mxu0 0
    %2002 = vmatprep.subr.bf16.mxu0 0
    %2003 = vmatpush1.bf16.msra.mxu0 0
    %2004 = vmatprep.subr.bf16.mxu0 0
    %2005 = vmatpush1.bf16.msra.mxu0 0
    %2006 = vmatprep.mubr.bf16.mxu0 0
    %2007 = vmatmul.mubr.bf16.gmra.mrb[0].mxu0 %v1969
    %v2008 = vpop.f32.mrb[0].mxu0
    %v2009 = vadd.f32 0.0, %v2008
    %v2010 = vpop.f32.mrb[0].mxu0
    %v2011 = vpop.f32.mrb[0].mxu0
    %v2012 = vadd.f32 0.0, %v2011
    %v2013 = vpop.f32.mrb[0].mxu0
    %2014 = vmatprep.mubr.bf16.mxu0 0
    %2015 = vmatmul.mubr.bf16.gmra.mrb[0].mxu0 %v1972
    %v2016 = vpop.f32.mrb[0].mxu0
    %v2017 = vadd.f32 0.0, %v2016
    %v2018 = vpop.f32.mrb[0].mxu0
    %v2019 = vpop.f32.mrb[0].mxu0
    %v2020 = vadd.f32 0.0, %v2019
    %v2021 = vpop.f32.mrb[0].mxu0
    %2022 = vdwg.mxu0
    %v2027 = vunpack.c.l.b16 %v1950
    %v2028 = vunpack.c.l.b16 %v1951
    %v2029 = vunpack.c.l.b16 %v1952
    %v2030 = vunpack.c.l.b16 %v1953
    %v2031 = vpack.c.b16 %v2028, %v2027
    %v2032 = vpack.c.b16 %v2030, %v2029
    %v2034 = vsel %vm90, %v2031, 0
    %v2037 = vsel %vm90, %v2032, 0
    %2039 = vmatprep.subr.bf16.mxu0 0
    %2040 = vmatpush1.bf16.msra.mxu0 %v1935
    %2041 = vmatprep.subr.bf16.mxu0 0
    %2042 = vmatpush1.bf16.msra.mxu0 %v1938
    %2043 = vmatprep.subr.bf16.mxu0 0
    %2044 = vmatpush1.bf16.msra.mxu0 0
    %2045 = vmatprep.subr.bf16.mxu0 0
    %2046 = vmatpush1.bf16.msra.mxu0 0
    %2047 = vmatprep.subr.bf16.mxu0 0
    %2048 = vmatpush1.bf16.msra.mxu0 0
    %2049 = vmatprep.subr.bf16.mxu0 0
    %2050 = vmatpush1.bf16.msra.mxu0 0
    %2051 = vmatprep.subr.bf16.mxu0 0
    %2052 = vmatpush1.bf16.msra.mxu0 0
    %2053 = vmatprep.subr.bf16.mxu0 0
    %2054 = vmatpush1.bf16.msra.mxu0 0
    %2055 = vmatprep.subr.bf16.mxu0 0
    %2056 = vmatpush1.bf16.msra.mxu0 0
    %2057 = vmatprep.subr.bf16.mxu0 0
    %2058 = vmatpush1.bf16.msra.mxu0 0
    %2059 = vmatprep.subr.bf16.mxu0 0
    %2060 = vmatpush1.bf16.msra.mxu0 0
    %2061 = vmatprep.subr.bf16.mxu0 0
    %2062 = vmatpush1.bf16.msra.mxu0 0
    %2063 = vmatprep.subr.bf16.mxu0 0
    %2064 = vmatpush1.bf16.msra.mxu0 0
    %2065 = vmatprep.subr.bf16.mxu0 0
    %2066 = vmatpush1.bf16.msra.mxu0 0
    %2067 = vmatprep.subr.bf16.mxu0 0
    %2068 = vmatpush1.bf16.msra.mxu0 0
    %2069 = vmatprep.subr.bf16.mxu0 0
    %2070 = vmatpush1.bf16.msra.mxu0 0
    %2071 = vmatprep.mubr.bf16.mxu0 0
    %2072 = vmatmul.mubr.bf16.gmra.mrb[0].mxu0 %v2034
    %v2073 = vpop.f32.mrb[0].mxu0
    %v2074 = vadd.f32 %v2009, %v2073
    %v2075 = vpop.f32.mrb[0].mxu0
    %v2076 = vpop.f32.mrb[0].mxu0
    %v2077 = vadd.f32 %v2012, %v2076
    %v2078 = vpop.f32.mrb[0].mxu0
    %2079 = vmatprep.mubr.bf16.mxu0 0
    %2080 = vmatmul.mubr.bf16.gmra.mrb[0].mxu0 %v2037
    %v2081 = vpop.f32.mrb[0].mxu0
    %v2082 = vadd.f32 %v2017, %v2081
    %v2083 = vpop.f32.mrb[0].mxu0
    %v2084 = vpop.f32.mrb[0].mxu0
    %v2085 = vadd.f32 %v2020, %v2084
    %v2086 = vpop.f32.mrb[0].mxu0
    %2087 = vdwg.mxu0
    %v2088 = vld [vmem:[%s964] sm:$0xf]
    %v2089 = vld [vmem:[%s964 + $0x4] sm:$0xf]
    %v2090 = vld [vmem:[%s964 + $0x8] sm:$0xf]
    %v2091 = vld [vmem:[%s964 + $0xc] sm:$0xf]
    %v2096 = vunpack.c.l.b16 %v2088
    %v2097 = vunpack.c.l.b16 %v2089
    %v2098 = vunpack.c.l.b16 %v2090
    %v2099 = vunpack.c.l.b16 %v2091
    %v2100 = vpack.c.b16 %v2097, %v2096
    %v2101 = vpack.c.b16 %v2099, %v2098
    %v2103 = vsel %vm90, %v2100, 0
    %v2106 = vsel %vm90, %v2101, 0
    %2108 = vmatprep.subr.bf16.mxu0 0
    %2109 = vmatpush1.bf16.msra.mxu0 %v1945
    %2110 = vmatprep.subr.bf16.mxu0 0
    %2111 = vmatpush1.bf16.msra.mxu0 %v1948
    %2112 = vmatprep.subr.bf16.mxu0 0
    %2113 = vmatpush1.bf16.msra.mxu0 0
    %2114 = vmatprep.subr.bf16.mxu0 0
    %2115 = vmatpush1.bf16.msra.mxu0 0
    %2116 = vmatprep.subr.bf16.mxu0 0
    %2117 = vmatpush1.bf16.msra.mxu0 0
    %2118 = vmatprep.subr.bf16.mxu0 0
    %2119 = vmatpush1.bf16.msra.mxu0 0
    %2120 = vmatprep.subr.bf16.mxu0 0
    %2121 = vmatpush1.bf16.msra.mxu0 0
    %2122 = vmatprep.subr.bf16.mxu0 0
    %2123 = vmatpush1.bf16.msra.mxu0 0
    %2124 = vmatprep.subr.bf16.mxu0 0
    %2125 = vmatpush1.bf16.msra.mxu0 0
    %2126 = vmatprep.subr.bf16.mxu0 0
    %2127 = vmatpush1.bf16.msra.mxu0 0
    %2128 = vmatprep.subr.bf16.mxu0 0
    %2129 = vmatpush1.bf16.msra.mxu0 0
    %2130 = vmatprep.subr.bf16.mxu0 0
    %2131 = vmatpush1.bf16.msra.mxu0 0
    %2132 = vmatprep.subr.bf16.mxu0 0
    %2133 = vmatpush1.bf16.msra.mxu0 0
    %2134 = vmatprep.subr.bf16.mxu0 0
    %2135 = vmatpush1.bf16.msra.mxu0 0
    %2136 = vmatprep.subr.bf16.mxu0 0
    %2137 = vmatpush1.bf16.msra.mxu0 0
    %2138 = vmatprep.subr.bf16.mxu0 0
    %2139 = vmatpush1.bf16.msra.mxu0 0
    %2140 = vmatprep.mubr.bf16.mxu0 0
    %2141 = vmatmul.mubr.bf16.gmra.mrb[0].mxu0 %v2103
    %v2142 = vpop.f32.mrb[0].mxu0
    %v2143 = vadd.f32 0.0, %v2142
    %v2144 = vpop.f32.mrb[0].mxu0
    %v2145 = vpop.f32.mrb[0].mxu0
    %v2146 = vadd.f32 0.0, %v2145
    %v2147 = vpop.f32.mrb[0].mxu0
    %2148 = vmatprep.mubr.bf16.mxu0 0
    %2149 = vmatmul.mubr.bf16.gmra.mrb[0].mxu0 %v2106
    %v2150 = vpop.f32.mrb[0].mxu0
    %v2151 = vadd.f32 0.0, %v2150
    %v2152 = vpop.f32.mrb[0].mxu0
    %v2153 = vpop.f32.mrb[0].mxu0
    %v2154 = vadd.f32 0.0, %v2153
    %v2155 = vpop.f32.mrb[0].mxu0
    %2156 = vdwg.mxu0
    %v2157 = vadd.f32 %v2074, %v2143
    %v2158 = vadd.f32 %v2077, %v2146
    %v2159 = vadd.f32 %v2082, %v2151
    %v2160 = vadd.f32 %v2085, %v2154
    %v2161 = vld [vmem:[%s1038] sm:$0xff]
    %v2162 = vld [vmem:[%s1038 + $0x8] sm:$0xff]
    %v2163 = vld [vmem:[%s1038 + $0x10] sm:$0xff]
    %v2164 = vld [vmem:[%s1038 + $0x18] sm:$0xff]
    %2166 = vset.pattern.permute.xlu0 0
    %2167 = vperm.xlu0 %2166, %v2161
    %v2168 = vpop.permute.xlu0 %2167
    %2171 = vset.pattern.permute.xlu0 0
    %2172 = vperm.xlu0 %2171, %v2162
    %v2173 = vpop.permute.xlu0 %2172
    %2176 = vset.pattern.permute.xlu0 0
    %2177 = vperm.xlu0 %2176, %v2163
    %v2178 = vpop.permute.xlu0 %2177
    %2181 = vset.pattern.permute.xlu0 0
    %2182 = vperm.xlu0 %2181, %v2164
    %v2183 = vpop.permute.xlu0 %2182
    %v2185 = vadd.f32 %v2157, %v2168
    %v2186 = vadd.f32 %v2158, %v2173
    %v2187 = vadd.f32 %v2159, %v2178
    %v2188 = vadd.f32 %v2160, %v2183
    %v2189 = vmax.f32 %v2185, 0.0
    %v2190 = vmax.f32 %v2186, 0.0
    %v2191 = vmax.f32 %v2187, 0.0
    %v2192 = vmax.f32 %v2188, 0.0
    %v2193 = vpack.c.bf16 %v2190, %v2189
    %v2194 = vpack.c.bf16 %v2192, %v2191
    %v2195 = vld [vmem:[%s1073] sm:$0xf]
    %v2196 = vld [vmem:[%s1073 + $0x4] sm:$0xf]
    %v2197 = vld [vmem:[%s1073 + $0x8] sm:$0xf]
    %v2198 = vld [vmem:[%s1073 + $0xc] sm:$0xf]
    %v2199 = vld [vmem:[%s1078] sm:$0xff]
    %v2200 = vld [vmem:[%s1078 + $0x8] sm:$0xff]
    %v2201 = vld [vmem:[%s1078 + $0x10] sm:$0xff]
    %v2202 = vld [vmem:[%s1078 + $0x18] sm:$0xff]
    %2204 = vset.pattern.permute.xlu0 0
    %2205 = vperm.xlu0 %2204, %v2199
    %v2206 = vpop.permute.xlu0 %2205
    %2209 = vset.pattern.permute.xlu0 0
    %2210 = vperm.xlu0 %2209, %v2200
    %v2211 = vpop.permute.xlu0 %2210
    %2214 = vset.pattern.permute.xlu0 0
    %2215 = vperm.xlu0 %2214, %v2201
    %v2216 = vpop.permute.xlu0 %2215
    %2219 = vset.pattern.permute.xlu0 0
    %2220 = vperm.xlu0 %2219, %v2202
    %v2221 = vpop.permute.xlu0 %2220
    %v2227 = vunpack.c.l.b16 %v2195
    %v2228 = vunpack.c.l.b16 %v2196
    %v2229 = vunpack.c.l.b16 %v2197
    %v2230 = vunpack.c.l.b16 %v2198
    %v2231 = vpack.c.b16 %v2228, %v2227
    %v2232 = vpack.c.b16 %v2230, %v2229
    %v2234 = vsel %vm90, %v2231, 0
    %v2237 = vsel %vm90, %v2232, 0
    %2239 = vmatprep.subr.bf16.mxu0 0
    %2240 = vmatpush1.bf16.msra.mxu0 %v2193
    %2241 = vmatprep.subr.bf16.mxu0 0
    %2242 = vmatpush1.bf16.msra.mxu0 %v2194
    %2243 = vmatprep.subr.bf16.mxu0 0
    %2244 = vmatpush1.bf16.msra.mxu0 0
    %2245 = vmatprep.subr.bf16.mxu0 0
    %2246 = vmatpush1.bf16.msra.mxu0 0
    %2247 = vmatprep.subr.bf16.mxu0 0
    %2248 = vmatpush1.bf16.msra.mxu0 0
    %2249 = vmatprep.subr.bf16.mxu0 0
    %2250 = vmatpush1.bf16.msra.mxu0 0
    %2251 = vmatprep.subr.bf16.mxu0 0
    %2252 = vmatpush1.bf16.msra.mxu0 0
    %2253 = vmatprep.subr.bf16.mxu0 0
    %2254 = vmatpush1.bf16.msra.mxu0 0
    %2255 = vmatprep.subr.bf16.mxu0 0
    %2256 = vmatpush1.bf16.msra.mxu0 0
    %2257 = vmatprep.subr.bf16.mxu0 0
    %2258 = vmatpush1.bf16.msra.mxu0 0
    %2259 = vmatprep.subr.bf16.mxu0 0
    %2260 = vmatpush1.bf16.msra.mxu0 0
    %2261 = vmatprep.subr.bf16.mxu0 0
    %2262 = vmatpush1.bf16.msra.mxu0 0
    %2263 = vmatprep.subr.bf16.mxu0 0
    %2264 = vmatpush1.bf16.msra.mxu0 0
    %2265 = vmatprep.subr.bf16.mxu0 0
    %2266 = vmatpush1.bf16.msra.mxu0 0
    %2267 = vmatprep.subr.bf16.mxu0 0
    %2268 = vmatpush1.bf16.msra.mxu0 0
    %2269 = vmatprep.subr.bf16.mxu0 0
    %2270 = vmatpush1.bf16.msra.mxu0 0
    %2271 = vmatprep.mubr.bf16.mxu0 0
    %2272 = vmatmul.mubr.bf16.gmra.mrb[0].mxu0 %v2234
    %v2273 = vpop.f32.mrb[0].mxu0
    %v2274 = vadd.f32 %v2206, %v2273
    %v2275 = vpop.f32.mrb[0].mxu0
    %v2276 = vpop.f32.mrb[0].mxu0
    %v2277 = vadd.f32 %v2211, %v2276
    %v2278 = vpop.f32.mrb[0].mxu0
    %2279 = vmatprep.mubr.bf16.mxu0 0
    %2280 = vmatmul.mubr.bf16.gmra.mrb[0].mxu0 %v2237
    %v2281 = vpop.f32.mrb[0].mxu0
    %v2282 = vadd.f32 %v2216, %v2281
    %v2283 = vpop.f32.mrb[0].mxu0
    %v2284 = vpop.f32.mrb[0].mxu0
    %v2285 = vadd.f32 %v2221, %v2284
    %v2286 = vpop.f32.mrb[0].mxu0
    %2287 = vdwg.mxu0
    %v2288 = vadd.f32 %v1918, %v2274
    %v2289 = vadd.f32 %v1919, %v2277
    %v2290 = vadd.f32 %v1920, %v2282
    %v2291 = vadd.f32 %v1921, %v2285
    %s2292 = scalar_lea.vmem [#allocation5], 32
    %2293 = vst.msk [vmem:[%s2292] sm:$0xff] %vm1172, %v2288
    %2294 = vst.msk [vmem:[%s2292 + $0x8] sm:$0xff] %vm1172, %v2289
    %2295 = vst.msk [vmem:[%s2292 + $0x10] sm:$0xff] %vm1172, %v2290
    %2296 = vst.msk [vmem:[%s2292 + $0x18] sm:$0xff] %vm1172, %v2291
    // Predicated region
    $region26: #{tpu_custom_call.1} parent=1 // pred_check
      _
    $region27: #{tpu_custom_call.1} parent=1 // pred_check_branch
      %2298 = sbr.rel (0) target = $region29
    $region28: #{tpu_custom_call.1} parent=1 // pred_region
      %s2300 = ssub.s32 1024, 1024
      %2301 = vsyncadd [#allocation4], %s2300
      %s2302 = sshll.u32 [#allocation5], 4
      %s2303 = int_to_ptr.vmem [resolvable:$true] %s2302
      %2308 = dma.vmem_to_hbm [thread:$0]  %s2303, 1024, %s5, [#allocation4], 128, 128, 8
    $region29: #{tpu_custom_call.1} parent=1 // pred_fallthru
      _
    // Predicated region
    $region30: #{tpu_custom_call.1} parent=1 // pred_check
      _
    $region31: #{tpu_custom_call.1} parent=1 // pred_check_branch
      %2310 = sbr.rel (0) target = $region33
    $region32: #{tpu_custom_call.1} parent=1 // pred_region
      %2311 = dma.done [#allocation4], 1024
    $region33: #{tpu_custom_call.1} parent=1 // pred_fallthru
      _
    %2312 = vsyncpa [#allocation3], 1
    %2313 = vsyncpa [#allocation4], 1

</llo_original>
